<compile_context>
chip_gen: v7x
topology: tpu7x:2x2x1
jax: 0.10.0
libtpu: 0.0.40
codegen_flags: <defaults>
</compile_context>

<pallas_src>
import functools
import math

import jax
import jax.numpy as jnp
import numpy as np
from jax.experimental import pallas as pl
from jax.experimental.pallas import tpu as pltpu


def _round_up(n, m):
    return ((n + m - 1) // m) * m


def _kan_linear_kernel(x_ref, gridT_ref, inv_ref, w_ref, o_ref, slab_ref, *,
                       spline_order, n_knots, in_pad):
    # x_ref:     (TB, I_pad)              input batch tile (f32)
    # gridT_ref: (n_knots, I_pad)         spline knots (knots x padded features)
    # inv_ref:   (n_inv, I_pad)           precomputed (signed) knot-diff reciprocals
    # w_ref:     ((1+n_bases)*I_pad, O_pad)  fused [base_weight^T ; spline_weight], bf16
    # o_ref:     (TB, O_pad)              output tile (lane-dense, f32)
    # slab_ref:  (TB, (1+n_bases)*I_pad)  VMEM scratch slab, bf16
    x = x_ref[...]                                            # (TB, I_pad) f32

    # ---- base branch: SiLU with the divide pushed onto the EUP ---------------
    silu = x * pl.reciprocal(1.0 + jnp.exp(-x), approx=True)
    slab_ref[:, pl.ds(0, in_pad)] = silu.astype(slab_ref.dtype)

    # ---- hoisted x-vs-knot differences: one (TB, I_pad) tile per knot row ----
    d = [x - gridT_ref[pl.ds(j, 1), :] for j in range(n_knots)]

    # ---- order-0 indicator bases from shared comparisons ---------------------
    ge = [dj >= 0.0 for dj in d]                              # x >= g[j]
    bases = [jnp.logical_and(ge[j], jnp.logical_not(ge[j + 1])).astype(jnp.float32)
             for j in range(n_knots - 1)]

    # ---- Cox-de Boor recursion: pure multiply/add on x-dependent terms -------
    # inv_ref holds  1/(g[j+k]-g[j])  and  -1/(g[j+k+1]-g[j+1])  (sign folded in).
    off = 0
    for k in range(1, spline_order + 1):
        m = n_knots - 1 - k
        nxt = []
        for j in range(m):
            inv_dl = inv_ref[pl.ds(off + 2 * j, 1), :]        #  1/(g[j+k]   - g[j])
            ninv_dr = inv_ref[pl.ds(off + 2 * j + 1, 1), :]   # -1/(g[j+k+1] - g[j+1])
            nxt.append(d[j] * inv_dl * bases[j]
                       + d[j + k + 1] * ninv_dr * bases[j + 1])
        bases = nxt
        off += 2 * m
    # len(bases) == n_knots - 1 - spline_order == n_bases

    # ---- store final-order bases into their 128-aligned slab columns ---------
    for s, b in enumerate(bases):
        slab_ref[:, pl.ds((1 + s) * in_pad, in_pad)] = b.astype(slab_ref.dtype)

    # ---- single fused MXU matmul: bf16 operands, f32 accumulation ------------
    o_ref[...] = jnp.dot(slab_ref[...], w_ref[...],
                         preferred_element_type=jnp.float32).astype(o_ref.dtype)


def kan_linear_forward(x, grid, base_weight, spline_weight, *, spline_order):
    """Pallas implementation of KANLinear_v1.forward."""
    B = x.shape[0]
    x2 = x.reshape(B, -1).astype(jnp.float32)                 # (B, I)
    I = x2.shape[1]
    O = base_weight.shape[0]
    n_knots = grid.shape[1]
    n_bases = n_knots - 1 - spline_order
    assert spline_weight.shape == (O, I, n_bases)

    # ---- lane packing: pad in_features to a multiple of 128 -------------------
    I_pad = _round_up(I, 128)
    if I_pad != I:
        x2 = jnp.pad(x2, ((0, 0), (0, I_pad - I)))            # zero features
    gridT = jnp.transpose(grid).astype(jnp.float32)           # (n_knots, I)
    if I_pad != I:
        # Edge-pad the knot table so padded columns keep strictly increasing
        # knots (no inf in the precomputed reciprocals); their W rows are zero.
        gridT = jnp.pad(gridT, ((0, 0), (0, I_pad - I)), mode="edge")

    # ---- precompute signed knot-difference reciprocals (x-independent) --------
    inv_rows = []
    for k in range(1, spline_order + 1):
        m = n_knots - 1 - k
        for j in range(m):
            inv_rows.append(1.0 / (gridT[j + k] - gridT[j]))          #  left term
            inv_rows.append(-1.0 / (gridT[j + k + 1] - gridT[j + 1]))  # right term (sign folded)
    if inv_rows:
        inv_pack = jnp.stack(inv_rows, axis=0)                # (n_inv, I_pad)
    else:
        inv_pack = jnp.zeros((1, I_pad), jnp.float32)
    n_inv = inv_pack.shape[0]

    # ---- fused weight: [base_weight^T ; spline_weight (s-major, i-minor)] -----
    bwT = jnp.transpose(base_weight).astype(jnp.float32)                 # (I, O)
    bwT = jnp.pad(bwT, ((0, I_pad - I), (0, 0)))                         # (I_pad, O)
    sw = jnp.transpose(spline_weight, (2, 1, 0)).astype(jnp.float32)     # (n_bases, I, O)
    sw = jnp.pad(sw, ((0, 0), (0, I_pad - I), (0, 0)))                   # (n_bases, I_pad, O)
    sw = sw.reshape(n_bases * I_pad, O)
    W = jnp.concatenate([bwT, sw], axis=0)                               # (K, O)
    K = (1 + n_bases) * I_pad                                            # multiple of 128

    # Lane-dense output: pad O to a multiple of 128 (unmasked stores).
    O_pad = _round_up(O, 128)
    if O_pad != O:
        W = jnp.pad(W, ((0, 0), (0, O_pad - O)))
    W = W.astype(jnp.bfloat16)                                # bf16 MXU operand

    # ---- batch tiling: TB multiple of 16, cap 256, >=2 grid steps when possible
    if B >= 32:
        TB = min(256, _round_up(-(-B // 2), 16))              # feed both v7x TCs
    else:
        TB = _round_up(max(B, 1), 16)
    B_pad = _round_up(B, TB)
    if B_pad != B:
        x2 = jnp.pad(x2, ((0, B_pad - B), (0, 0)))

    # ---- VMEM budget (explicit limit; v5e scoped default is only 16 MiB) ------
    vmem_need = (2 * TB * I_pad * 4            # x (double-buffered)
                 + 2 * n_knots * I_pad * 4     # gridT
                 + 2 * n_inv * I_pad * 4       # inv reciprocals
                 + 2 * K * O_pad * 2           # fused weight (bf16)
                 + 2 * TB * O_pad * 4          # output
                 + TB * K * 2)                 # slab scratch (bf16)
    vmem_limit = int(min(64 * 1024 * 1024, max(3 * vmem_need, 16 * 1024 * 1024)))

    kernel = functools.partial(_kan_linear_kernel,
                               spline_order=spline_order, n_knots=n_knots,
                               in_pad=I_pad)

    out = pl.pallas_call(
        kernel,
        out_shape=jax.ShapeDtypeStruct((B_pad, O_pad), jnp.float32),
        grid=(B_pad // TB,),
        in_specs=[
            pl.BlockSpec((TB, I_pad), lambda b: (b, 0)),
            pl.BlockSpec((n_knots, I_pad), lambda b: (0, 0)),   # resident across grid
            pl.BlockSpec((n_inv, I_pad), lambda b: (0, 0)),     # resident across grid
            pl.BlockSpec((K, O_pad), lambda b: (0, 0)),         # resident across grid
        ],
        out_specs=pl.BlockSpec((TB, O_pad), lambda b: (b, 0)),
        scratch_shapes=[pltpu.VMEM((TB, K), jnp.bfloat16)],     # slab scratch
        compiler_params=pltpu.CompilerParams(
            dimension_semantics=("parallel",),
            vmem_limit_bytes=vmem_limit),
    )(x2, gridT, inv_pack, W)

    return out[:B, :O]


def kan_linear_ref(x, grid, base_weight, spline_weight, spline_order):
    """Pure-JAX f32 reference matching the PyTorch forward exactly."""
    B = x.shape[0]
    x2 = x.reshape(B, -1)
    silu = x2 * (1.0 / (1.0 + jnp.exp(-x2)))
    base = silu @ base_weight.T
    xe = x2[:, :, None]
    bases = jnp.logical_and(xe >= grid[:, :-1], xe < grid[:, 1:]).astype(x2.dtype)
    for k in range(1, spline_order + 1):
        bases = ((xe - grid[:, :-(k + 1)]) / (grid[:, k:-1] - grid[:, :-(k + 1)])
                 * bases[:, :, :-1]
                 + (grid[:, k + 1:] - xe) / (grid[:, k + 1:] - grid[:, 1:-k])
                 * bases[:, :, 1:])
    spline = bases.reshape(B, -1) @ spline_weight.reshape(spline_weight.shape[0], -1).T
    return base + spline


if __name__ == "__main__":
    key = jax.random.PRNGKey(0)
    B, C, H, W = 8, 4, 4, 4
    in_features = C * H * W                     # forward does x.view(B, -1)
    out_features = 32
    grid_size, spline_order = 5, 3
    grid_range = (-1.0, 1.0)

    kx, kb, ks = jax.random.split(key, 3)
    x = jax.random.uniform(kx, (B, C, H, W), jnp.float32, minval=-1.0, maxval=1.0)

    # Deterministic parameter init (same shapes as the PyTorch module).
    h = (grid_range[1] - grid_range[0]) / grid_size
    knots = (jnp.arange(-spline_order, grid_size + spline_order + 1,
                        dtype=jnp.float32) * h + grid_range[0])
    grid_buf = jnp.broadcast_to(knots, (in_features, knots.shape[0]))  # (I, n_knots)

    bound = math.sqrt(6.0 / in_features)  # kaiming-uniform-like bound
    base_weight = jax.random.uniform(kb, (out_features, in_features),
                                     jnp.float32, minval=-bound, maxval=bound)
    # TODO(synk): PyTorch initializes spline_weight via curve2coeff (lstsq of noise);
    #             here we use a deterministic small uniform init of identical shape.
    spline_weight = jax.random.uniform(
        ks, (out_features, in_features, grid_size + spline_order),
        jnp.float32, minval=-0.1, maxval=0.1)
    # Note: spline_scaler exists as a parameter in the module but is unused in forward.

    out = kan_linear_forward(x, grid_buf, base_weight, spline_weight,
                             spline_order=spline_order)
    out = jax.block_until_ready(out)

    ref = kan_linear_ref(x, grid_buf, base_weight, spline_weight, spline_order)
    # Tolerance loosened vs. the f32 version: bf16 MXU operands + precomputed
    # reciprocals + EUP approx reciprocal in SiLU (per perf review).
    np.testing.assert_allclose(np.asarray(out), np.asarray(ref),
                               rtol=2e-2, atol=2e-2)
    print("KERNEL_OK")
</pallas_src>

<mosaic_0001>
module attributes {stable_mosaic.version = 11 : i64} {
  func.func @_kan_linear_kernel(%arg0: i32, %arg1: memref<16x128xf32, #tpu.memory_space<vmem>>, %arg2: memref<12x128xf32, #tpu.memory_space<vmem>>, %arg3: memref<54x128xf32, #tpu.memory_space<vmem>>, %arg4: memref<1152x128xbf16, #tpu.memory_space<vmem>>, %arg5: memref<16x128xf32, #tpu.memory_space<vmem>>, %arg6: memref<16x1152xbf16, #tpu.memory_space<vmem>>) attributes {dimension_semantics = [#tpu.dimension_semantics<parallel>], iteration_bounds = array<i64: 1>, scalar_prefetch = 0 : i64, scratch_operands = 1 : i64, tpu.core_type = #tpu.core_type<tc>, window_params = [{transform_indices = @transform_0, window_bounds = array<i64: 16, 128>}, {pipeline_mode = #tpu.pipeline_mode<synchronous>, transform_indices = @transform_1, window_bounds = array<i64: 12, 128>}, {pipeline_mode = #tpu.pipeline_mode<synchronous>, transform_indices = @transform_2, window_bounds = array<i64: 54, 128>}, {pipeline_mode = #tpu.pipeline_mode<synchronous>, transform_indices = @transform_3, window_bounds = array<i64: 1152, 128>}, {transform_indices = @transform_4, window_bounds = array<i64: 16, 128>}]} {
    %c0 = arith.constant 0 : index
    %c0_0 = arith.constant 0 : index
    %0 = vector.load %arg1[%c0, %c0_0] : memref<16x128xf32, #tpu.memory_space<vmem>>, vector<16x128xf32>
    %cst = arith.constant 0.000000e+00 : f32
    %1 = vector.broadcast %cst : f32 to vector<16x128xf32>
    %2 = arith.subf %1, %0 : vector<16x128xf32>
    %3 = math.exp %2 : vector<16x128xf32>
    %cst_1 = arith.constant 1.000000e+00 : f32
    %4 = vector.broadcast %cst_1 : f32 to vector<16x128xf32>
    %5 = arith.addf %4, %3 : vector<16x128xf32>
    %6 = tpu.reciprocal %5 {approx = true} : vector<16x128xf32> -> vector<16x128xf32>
    %7 = arith.mulf %0, %6 : vector<16x128xf32>
    %8 = arith.truncf %7 : vector<16x128xf32> to vector<16x128xbf16>
    %c0_2 = arith.constant 0 : index
    %c0_3 = arith.constant 0 : index
    %9 = vector.load %arg6[%c0_2, %c0_3] : memref<16x1152xbf16, #tpu.memory_space<vmem>>, vector<16x128xbf16>
    tpu.vector_store %arg6[%c0_2, %c0_3], %8 {strides = array<i32>} : memref<16x1152xbf16, #tpu.memory_space<vmem>>, vector<16x128xbf16>,
    %c0_4 = arith.constant 0 : index
    %c0_5 = arith.constant 0 : index
    %10 = vector.load %arg2[%c0_4, %c0_5] : memref<12x128xf32, #tpu.memory_space<vmem>>, vector<1x128xf32>
    %11 = vector.broadcast %10 : vector<1x128xf32> to vector<16x128xf32>
    %12 = arith.subf %0, %11 : vector<16x128xf32>
    %c1 = arith.constant 1 : index
    %c0_6 = arith.constant 0 : index
    %13 = vector.load %arg2[%c1, %c0_6] : memref<12x128xf32, #tpu.memory_space<vmem>>, vector<1x128xf32>
    %14 = vector.broadcast %13 : vector<1x128xf32> to vector<16x128xf32>
    %15 = arith.subf %0, %14 : vector<16x128xf32>
    %c2 = arith.constant 2 : index
    %c0_7 = arith.constant 0 : index
    %16 = vector.load %arg2[%c2, %c0_7] : memref<12x128xf32, #tpu.memory_space<vmem>>, vector<1x128xf32>
    %17 = vector.broadcast %16 : vector<1x128xf32> to vector<16x128xf32>
    %18 = arith.subf %0, %17 : vector<16x128xf32>
    %c3 = arith.constant 3 : index
    %c0_8 = arith.constant 0 : index
    %19 = vector.load %arg2[%c3, %c0_8] : memref<12x128xf32, #tpu.memory_space<vmem>>, vector<1x128xf32>
    %20 = vector.broadcast %19 : vector<1x128xf32> to vector<16x128xf32>
    %21 = arith.subf %0, %20 : vector<16x128xf32>
    %c4 = arith.constant 4 : index
    %c0_9 = arith.constant 0 : index
    %22 = vector.load %arg2[%c4, %c0_9] : memref<12x128xf32, #tpu.memory_space<vmem>>, vector<1x128xf32>
    %23 = vector.broadcast %22 : vector<1x128xf32> to vector<16x128xf32>
    %24 = arith.subf %0, %23 : vector<16x128xf32>
    %c5 = arith.constant 5 : index
    %c0_10 = arith.constant 0 : index
    %25 = vector.load %arg2[%c5, %c0_10] : memref<12x128xf32, #tpu.memory_space<vmem>>, vector<1x128xf32>
    %26 = vector.broadcast %25 : vector<1x128xf32> to vector<16x128xf32>
    %27 = arith.subf %0, %26 : vector<16x128xf32>
    %c6 = arith.constant 6 : index
    %c0_11 = arith.constant 0 : index
    %28 = vector.load %arg2[%c6, %c0_11] : memref<12x128xf32, #tpu.memory_space<vmem>>, vector<1x128xf32>
    %29 = vector.broadcast %28 : vector<1x128xf32> to vector<16x128xf32>
    %30 = arith.subf %0, %29 : vector<16x128xf32>
    %c7 = arith.constant 7 : index
    %c0_12 = arith.constant 0 : index
    %31 = vector.load %arg2[%c7, %c0_12] : memref<12x128xf32, #tpu.memory_space<vmem>>, vector<1x128xf32>
    %32 = vector.broadcast %31 : vector<1x128xf32> to vector<16x128xf32>
    %33 = arith.subf %0, %32 : vector<16x128xf32>
    %c8 = arith.constant 8 : index
    %c0_13 = arith.constant 0 : index
    %34 = vector.load %arg2[%c8, %c0_13] : memref<12x128xf32, #tpu.memory_space<vmem>>, vector<1x128xf32>
    %35 = vector.broadcast %34 : vector<1x128xf32> to vector<16x128xf32>
    %36 = arith.subf %0, %35 : vector<16x128xf32>
    %c9 = arith.constant 9 : index
    %c0_14 = arith.constant 0 : index
    %37 = vector.load %arg2[%c9, %c0_14] : memref<12x128xf32, #tpu.memory_space<vmem>>, vector<1x128xf32>
    %38 = vector.broadcast %37 : vector<1x128xf32> to vector<16x128xf32>
    %39 = arith.subf %0, %38 : vector<16x128xf32>
    %c10 = arith.constant 10 : index
    %c0_15 = arith.constant 0 : index
    %40 = vector.load %arg2[%c10, %c0_15] : memref<12x128xf32, #tpu.memory_space<vmem>>, vector<1x128xf32>
    %41 = vector.broadcast %40 : vector<1x128xf32> to vector<16x128xf32>
    %42 = arith.subf %0, %41 : vector<16x128xf32>
    %c11 = arith.constant 11 : index
    %c0_16 = arith.constant 0 : index
    %43 = vector.load %arg2[%c11, %c0_16] : memref<12x128xf32, #tpu.memory_space<vmem>>, vector<1x128xf32>
    %44 = vector.broadcast %43 : vector<1x128xf32> to vector<16x128xf32>
    %45 = arith.subf %0, %44 : vector<16x128xf32>
    %cst_17 = arith.constant 0.000000e+00 : f32
    %46 = vector.broadcast %cst_17 : f32 to vector<16x128xf32>
    %47 = arith.cmpf oge, %12, %46 : vector<16x128xf32>
    %cst_18 = arith.constant 0.000000e+00 : f32
    %48 = vector.broadcast %cst_18 : f32 to vector<16x128xf32>
    %49 = arith.cmpf oge, %15, %48 : vector<16x128xf32>
    %cst_19 = arith.constant 0.000000e+00 : f32
    %50 = vector.broadcast %cst_19 : f32 to vector<16x128xf32>
    %51 = arith.cmpf oge, %18, %50 : vector<16x128xf32>
    %cst_20 = arith.constant 0.000000e+00 : f32
    %52 = vector.broadcast %cst_20 : f32 to vector<16x128xf32>
    %53 = arith.cmpf oge, %21, %52 : vector<16x128xf32>
    %cst_21 = arith.constant 0.000000e+00 : f32
    %54 = vector.broadcast %cst_21 : f32 to vector<16x128xf32>
    %55 = arith.cmpf oge, %24, %54 : vector<16x128xf32>
    %cst_22 = arith.constant 0.000000e+00 : f32
    %56 = vector.broadcast %cst_22 : f32 to vector<16x128xf32>
    %57 = arith.cmpf oge, %27, %56 : vector<16x128xf32>
    %cst_23 = arith.constant 0.000000e+00 : f32
    %58 = vector.broadcast %cst_23 : f32 to vector<16x128xf32>
    %59 = arith.cmpf oge, %30, %58 : vector<16x128xf32>
    %cst_24 = arith.constant 0.000000e+00 : f32
    %60 = vector.broadcast %cst_24 : f32 to vector<16x128xf32>
    %61 = arith.cmpf oge, %33, %60 : vector<16x128xf32>
    %cst_25 = arith.constant 0.000000e+00 : f32
    %62 = vector.broadcast %cst_25 : f32 to vector<16x128xf32>
    %63 = arith.cmpf oge, %36, %62 : vector<16x128xf32>
    %cst_26 = arith.constant 0.000000e+00 : f32
    %64 = vector.broadcast %cst_26 : f32 to vector<16x128xf32>
    %65 = arith.cmpf oge, %39, %64 : vector<16x128xf32>
    %cst_27 = arith.constant 0.000000e+00 : f32
    %66 = vector.broadcast %cst_27 : f32 to vector<16x128xf32>
    %67 = arith.cmpf oge, %42, %66 : vector<16x128xf32>
    %cst_28 = arith.constant 0.000000e+00 : f32
    %68 = vector.broadcast %cst_28 : f32 to vector<16x128xf32>
    %69 = arith.cmpf oge, %45, %68 : vector<16x128xf32>
    %cst_29 = arith.constant dense<true> : vector<16x128xi1>
    %70 = arith.xori %49, %cst_29 : vector<16x128xi1>
    %71 = arith.andi %47, %70 : vector<16x128xi1>
    %72 = arith.extui %71 : vector<16x128xi1> to vector<16x128xi32>
    %73 = arith.sitofp %72 : vector<16x128xi32> to vector<16x128xf32>
    %cst_30 = arith.constant dense<true> : vector<16x128xi1>
    %74 = arith.xori %51, %cst_30 : vector<16x128xi1>
    %75 = arith.andi %49, %74 : vector<16x128xi1>
    %76 = arith.extui %75 : vector<16x128xi1> to vector<16x128xi32>
    %77 = arith.sitofp %76 : vector<16x128xi32> to vector<16x128xf32>
    %cst_31 = arith.constant dense<true> : vector<16x128xi1>
    %78 = arith.xori %53, %cst_31 : vector<16x128xi1>
    %79 = arith.andi %51, %78 : vector<16x128xi1>
    %80 = arith.extui %79 : vector<16x128xi1> to vector<16x128xi32>
    %81 = arith.sitofp %80 : vector<16x128xi32> to vector<16x128xf32>
    %cst_32 = arith.constant dense<true> : vector<16x128xi1>
    %82 = arith.xori %55, %cst_32 : vector<16x128xi1>
    %83 = arith.andi %53, %82 : vector<16x128xi1>
    %84 = arith.extui %83 : vector<16x128xi1> to vector<16x128xi32>
    %85 = arith.sitofp %84 : vector<16x128xi32> to vector<16x128xf32>
    %cst_33 = arith.constant dense<true> : vector<16x128xi1>
    %86 = arith.xori %57, %cst_33 : vector<16x128xi1>
    %87 = arith.andi %55, %86 : vector<16x128xi1>
    %88 = arith.extui %87 : vector<16x128xi1> to vector<16x128xi32>
    %89 = arith.sitofp %88 : vector<16x128xi32> to vector<16x128xf32>
    %cst_34 = arith.constant dense<true> : vector<16x128xi1>
    %90 = arith.xori %59, %cst_34 : vector<16x128xi1>
    %91 = arith.andi %57, %90 : vector<16x128xi1>
    %92 = arith.extui %91 : vector<16x128xi1> to vector<16x128xi32>
    %93 = arith.sitofp %92 : vector<16x128xi32> to vector<16x128xf32>
    %cst_35 = arith.constant dense<true> : vector<16x128xi1>
    %94 = arith.xori %61, %cst_35 : vector<16x128xi1>
    %95 = arith.andi %59, %94 : vector<16x128xi1>
    %96 = arith.extui %95 : vector<16x128xi1> to vector<16x128xi32>
    %97 = arith.sitofp %96 : vector<16x128xi32> to vector<16x128xf32>
    %cst_36 = arith.constant dense<true> : vector<16x128xi1>
    %98 = arith.xori %63, %cst_36 : vector<16x128xi1>
    %99 = arith.andi %61, %98 : vector<16x128xi1>
    %100 = arith.extui %99 : vector<16x128xi1> to vector<16x128xi32>
    %101 = arith.sitofp %100 : vector<16x128xi32> to vector<16x128xf32>
    %cst_37 = arith.constant dense<true> : vector<16x128xi1>
    %102 = arith.xori %65, %cst_37 : vector<16x128xi1>
    %103 = arith.andi %63, %102 : vector<16x128xi1>
    %104 = arith.extui %103 : vector<16x128xi1> to vector<16x128xi32>
    %105 = arith.sitofp %104 : vector<16x128xi32> to vector<16x128xf32>
    %cst_38 = arith.constant dense<true> : vector<16x128xi1>
    %106 = arith.xori %67, %cst_38 : vector<16x128xi1>
    %107 = arith.andi %65, %106 : vector<16x128xi1>
    %108 = arith.extui %107 : vector<16x128xi1> to vector<16x128xi32>
    %109 = arith.sitofp %108 : vector<16x128xi32> to vector<16x128xf32>
    %cst_39 = arith.constant dense<true> : vector<16x128xi1>
    %110 = arith.xori %69, %cst_39 : vector<16x128xi1>
    %111 = arith.andi %67, %110 : vector<16x128xi1>
    %112 = arith.extui %111 : vector<16x128xi1> to vector<16x128xi32>
    %113 = arith.sitofp %112 : vector<16x128xi32> to vector<16x128xf32>
    %c0_40 = arith.constant 0 : index
    %c0_41 = arith.constant 0 : index
    %114 = vector.load %arg3[%c0_40, %c0_41] : memref<54x128xf32, #tpu.memory_space<vmem>>, vector<1x128xf32>
    %c1_42 = arith.constant 1 : index
    %c0_43 = arith.constant 0 : index
    %115 = vector.load %arg3[%c1_42, %c0_43] : memref<54x128xf32, #tpu.memory_space<vmem>>, vector<1x128xf32>
    %116 = vector.broadcast %114 : vector<1x128xf32> to vector<16x128xf32>
    %117 = arith.mulf %12, %116 : vector<16x128xf32>
    %118 = arith.mulf %117, %73 : vector<16x128xf32>
    %119 = vector.broadcast %115 : vector<1x128xf32> to vector<16x128xf32>
    %120 = arith.mulf %18, %119 : vector<16x128xf32>
    %121 = arith.mulf %120, %77 : vector<16x128xf32>
    %122 = arith.addf %118, %121 : vector<16x128xf32>
    %c2_44 = arith.constant 2 : index
    %c0_45 = arith.constant 0 : index
    %123 = vector.load %arg3[%c2_44, %c0_45] : memref<54x128xf32, #tpu.memory_space<vmem>>, vector<1x128xf32>
    %c3_46 = arith.constant 3 : index
    %c0_47 = arith.constant 0 : index
    %124 = vector.load %arg3[%c3_46, %c0_47] : memref<54x128xf32, #tpu.memory_space<vmem>>, vector<1x128xf32>
    %125 = vector.broadcast %123 : vector<1x128xf32> to vector<16x128xf32>
    %126 = arith.mulf %15, %125 : vector<16x128xf32>
    %127 = arith.mulf %126, %77 : vector<16x128xf32>
    %128 = vector.broadcast %124 : vector<1x128xf32> to vector<16x128xf32>
    %129 = arith.mulf %21, %128 : vector<16x128xf32>
    %130 = arith.mulf %129, %81 : vector<16x128xf32>
    %131 = arith.addf %127, %130 : vector<16x128xf32>
    %c4_48 = arith.constant 4 : index
    %c0_49 = arith.constant 0 : index
    %132 = vector.load %arg3[%c4_48, %c0_49] : memref<54x128xf32, #tpu.memory_space<vmem>>, vector<1x128xf32>
    %c5_50 = arith.constant 5 : index
    %c0_51 = arith.constant 0 : index
    %133 = vector.load %arg3[%c5_50, %c0_51] : memref<54x128xf32, #tpu.memory_space<vmem>>, vector<1x128xf32>
    %134 = vector.broadcast %132 : vector<1x128xf32> to vector<16x128xf32>
    %135 = arith.mulf %18, %134 : vector<16x128xf32>
    %136 = arith.mulf %135, %81 : vector<16x128xf32>
    %137 = vector.broadcast %133 : vector<1x128xf32> to vector<16x128xf32>
    %138 = arith.mulf %24, %137 : vector<16x128xf32>
    %139 = arith.mulf %138, %85 : vector<16x128xf32>
    %140 = arith.addf %136, %139 : vector<16x128xf32>
    %c6_52 = arith.constant 6 : index
    %c0_53 = arith.constant 0 : index
    %141 = vector.load %arg3[%c6_52, %c0_53] : memref<54x128xf32, #tpu.memory_space<vmem>>, vector<1x128xf32>
    %c7_54 = arith.constant 7 : index
    %c0_55 = arith.constant 0 : index
    %142 = vector.load %arg3[%c7_54, %c0_55] : memref<54x128xf32, #tpu.memory_space<vmem>>, vector<1x128xf32>
    %143 = vector.broadcast %141 : vector<1x128xf32> to vector<16x128xf32>
    %144 = arith.mulf %21, %143 : vector<16x128xf32>
    %145 = arith.mulf %144, %85 : vector<16x128xf32>
    %146 = vector.broadcast %142 : vector<1x128xf32> to vector<16x128xf32>
    %147 = arith.mulf %27, %146 : vector<16x128xf32>
    %148 = arith.mulf %147, %89 : vector<16x128xf32>
    %149 = arith.addf %145, %148 : vector<16x128xf32>
    %c8_56 = arith.constant 8 : index
    %c0_57 = arith.constant 0 : index
    %150 = vector.load %arg3[%c8_56, %c0_57] : memref<54x128xf32, #tpu.memory_space<vmem>>, vector<1x128xf32>
    %c9_58 = arith.constant 9 : index
    %c0_59 = arith.constant 0 : index
    %151 = vector.load %arg3[%c9_58, %c0_59] : memref<54x128xf32, #tpu.memory_space<vmem>>, vector<1x128xf32>
    %152 = vector.broadcast %150 : vector<1x128xf32> to vector<16x128xf32>
    %153 = arith.mulf %24, %152 : vector<16x128xf32>
    %154 = arith.mulf %153, %89 : vector<16x128xf32>
    %155 = vector.broadcast %151 : vector<1x128xf32> to vector<16x128xf32>
    %156 = arith.mulf %30, %155 : vector<16x128xf32>
    %157 = arith.mulf %156, %93 : vector<16x128xf32>
    %158 = arith.addf %154, %157 : vector<16x128xf32>
    %c10_60 = arith.constant 10 : index
    %c0_61 = arith.constant 0 : index
    %159 = vector.load %arg3[%c10_60, %c0_61] : memref<54x128xf32, #tpu.memory_space<vmem>>, vector<1x128xf32>
    %c11_62 = arith.constant 11 : index
    %c0_63 = arith.constant 0 : index
    %160 = vector.load %arg3[%c11_62, %c0_63] : memref<54x128xf32, #tpu.memory_space<vmem>>, vector<1x128xf32>
    %161 = vector.broadcast %159 : vector<1x128xf32> to vector<16x128xf32>
    %162 = arith.mulf %27, %161 : vector<16x128xf32>
    %163 = arith.mulf %162, %93 : vector<16x128xf32>
    %164 = vector.broadcast %160 : vector<1x128xf32> to vector<16x128xf32>
    %165 = arith.mulf %33, %164 : vector<16x128xf32>
    %166 = arith.mulf %165, %97 : vector<16x128xf32>
    %167 = arith.addf %163, %166 : vector<16x128xf32>
    %c12 = arith.constant 12 : index
    %c0_64 = arith.constant 0 : index
    %168 = vector.load %arg3[%c12, %c0_64] : memref<54x128xf32, #tpu.memory_space<vmem>>, vector<1x128xf32>
    %c13 = arith.constant 13 : index
    %c0_65 = arith.constant 0 : index
    %169 = vector.load %arg3[%c13, %c0_65] : memref<54x128xf32, #tpu.memory_space<vmem>>, vector<1x128xf32>
    %170 = vector.broadcast %168 : vector<1x128xf32> to vector<16x128xf32>
    %171 = arith.mulf %30, %170 : vector<16x128xf32>
    %172 = arith.mulf %171, %97 : vector<16x128xf32>
    %173 = vector.broadcast %169 : vector<1x128xf32> to vector<16x128xf32>
    %174 = arith.mulf %36, %173 : vector<16x128xf32>
    %175 = arith.mulf %174, %101 : vector<16x128xf32>
    %176 = arith.addf %172, %175 : vector<16x128xf32>
    %c14 = arith.constant 14 : index
    %c0_66 = arith.constant 0 : index
    %177 = vector.load %arg3[%c14, %c0_66] : memref<54x128xf32, #tpu.memory_space<vmem>>, vector<1x128xf32>
    %c15 = arith.constant 15 : index
    %c0_67 = arith.constant 0 : index
    %178 = vector.load %arg3[%c15, %c0_67] : memref<54x128xf32, #tpu.memory_space<vmem>>, vector<1x128xf32>
    %179 = vector.broadcast %177 : vector<1x128xf32> to vector<16x128xf32>
    %180 = arith.mulf %33, %179 : vector<16x128xf32>
    %181 = arith.mulf %180, %101 : vector<16x128xf32>
    %182 = vector.broadcast %178 : vector<1x128xf32> to vector<16x128xf32>
    %183 = arith.mulf %39, %182 : vector<16x128xf32>
    %184 = arith.mulf %183, %105 : vector<16x128xf32>
    %185 = arith.addf %181, %184 : vector<16x128xf32>
    %c16 = arith.constant 16 : index
    %c0_68 = arith.constant 0 : index
    %186 = vector.load %arg3[%c16, %c0_68] : memref<54x128xf32, #tpu.memory_space<vmem>>, vector<1x128xf32>
    %c17 = arith.constant 17 : index
    %c0_69 = arith.constant 0 : index
    %187 = vector.load %arg3[%c17, %c0_69] : memref<54x128xf32, #tpu.memory_space<vmem>>, vector<1x128xf32>
    %188 = vector.broadcast %186 : vector<1x128xf32> to vector<16x128xf32>
    %189 = arith.mulf %36, %188 : vector<16x128xf32>
    %190 = arith.mulf %189, %105 : vector<16x128xf32>
    %191 = vector.broadcast %187 : vector<1x128xf32> to vector<16x128xf32>
    %192 = arith.mulf %42, %191 : vector<16x128xf32>
    %193 = arith.mulf %192, %109 : vector<16x128xf32>
    %194 = arith.addf %190, %193 : vector<16x128xf32>
    %c18 = arith.constant 18 : index
    %c0_70 = arith.constant 0 : index
    %195 = vector.load %arg3[%c18, %c0_70] : memref<54x128xf32, #tpu.memory_space<vmem>>, vector<1x128xf32>
    %c19 = arith.constant 19 : index
    %c0_71 = arith.constant 0 : index
    %196 = vector.load %arg3[%c19, %c0_71] : memref<54x128xf32, #tpu.memory_space<vmem>>, vector<1x128xf32>
    %197 = vector.broadcast %195 : vector<1x128xf32> to vector<16x128xf32>
    %198 = arith.mulf %39, %197 : vector<16x128xf32>
    %199 = arith.mulf %198, %109 : vector<16x128xf32>
    %200 = vector.broadcast %196 : vector<1x128xf32> to vector<16x128xf32>
    %201 = arith.mulf %45, %200 : vector<16x128xf32>
    %202 = arith.mulf %201, %113 : vector<16x128xf32>
    %203 = arith.addf %199, %202 : vector<16x128xf32>
    %c20 = arith.constant 20 : index
    %c0_72 = arith.constant 0 : index
    %204 = vector.load %arg3[%c20, %c0_72] : memref<54x128xf32, #tpu.memory_space<vmem>>, vector<1x128xf32>
    %c21 = arith.constant 21 : index
    %c0_73 = arith.constant 0 : index
    %205 = vector.load %arg3[%c21, %c0_73] : memref<54x128xf32, #tpu.memory_space<vmem>>, vector<1x128xf32>
    %206 = vector.broadcast %204 : vector<1x128xf32> to vector<16x128xf32>
    %207 = arith.mulf %12, %206 : vector<16x128xf32>
    %208 = arith.mulf %207, %122 : vector<16x128xf32>
    %209 = vector.broadcast %205 : vector<1x128xf32> to vector<16x128xf32>
    %210 = arith.mulf %21, %209 : vector<16x128xf32>
    %211 = arith.mulf %210, %131 : vector<16x128xf32>
    %212 = arith.addf %208, %211 : vector<16x128xf32>
    %c22 = arith.constant 22 : index
    %c0_74 = arith.constant 0 : index
    %213 = vector.load %arg3[%c22, %c0_74] : memref<54x128xf32, #tpu.memory_space<vmem>>, vector<1x128xf32>
    %c23 = arith.constant 23 : index
    %c0_75 = arith.constant 0 : index
    %214 = vector.load %arg3[%c23, %c0_75] : memref<54x128xf32, #tpu.memory_space<vmem>>, vector<1x128xf32>
    %215 = vector.broadcast %213 : vector<1x128xf32> to vector<16x128xf32>
    %216 = arith.mulf %15, %215 : vector<16x128xf32>
    %217 = arith.mulf %216, %131 : vector<16x128xf32>
    %218 = vector.broadcast %214 : vector<1x128xf32> to vector<16x128xf32>
    %219 = arith.mulf %24, %218 : vector<16x128xf32>
    %220 = arith.mulf %219, %140 : vector<16x128xf32>
    %221 = arith.addf %217, %220 : vector<16x128xf32>
    %c24 = arith.constant 24 : index
    %c0_76 = arith.constant 0 : index
    %222 = vector.load %arg3[%c24, %c0_76] : memref<54x128xf32, #tpu.memory_space<vmem>>, vector<1x128xf32>
    %c25 = arith.constant 25 : index
    %c0_77 = arith.constant 0 : index
    %223 = vector.load %arg3[%c25, %c0_77] : memref<54x128xf32, #tpu.memory_space<vmem>>, vector<1x128xf32>
    %224 = vector.broadcast %222 : vector<1x128xf32> to vector<16x128xf32>
    %225 = arith.mulf %18, %224 : vector<16x128xf32>
    %226 = arith.mulf %225, %140 : vector<16x128xf32>
    %227 = vector.broadcast %223 : vector<1x128xf32> to vector<16x128xf32>
    %228 = arith.mulf %27, %227 : vector<16x128xf32>
    %229 = arith.mulf %228, %149 : vector<16x128xf32>
    %230 = arith.addf %226, %229 : vector<16x128xf32>
    %c26 = arith.constant 26 : index
    %c0_78 = arith.constant 0 : index
    %231 = vector.load %arg3[%c26, %c0_78] : memref<54x128xf32, #tpu.memory_space<vmem>>, vector<1x128xf32>
    %c27 = arith.constant 27 : index
    %c0_79 = arith.constant 0 : index
    %232 = vector.load %arg3[%c27, %c0_79] : memref<54x128xf32, #tpu.memory_space<vmem>>, vector<1x128xf32>
    %233 = vector.broadcast %231 : vector<1x128xf32> to vector<16x128xf32>
    %234 = arith.mulf %21, %233 : vector<16x128xf32>
    %235 = arith.mulf %234, %149 : vector<16x128xf32>
    %236 = vector.broadcast %232 : vector<1x128xf32> to vector<16x128xf32>
    %237 = arith.mulf %30, %236 : vector<16x128xf32>
    %238 = arith.mulf %237, %158 : vector<16x128xf32>
    %239 = arith.addf %235, %238 : vector<16x128xf32>
    %c28 = arith.constant 28 : index
    %c0_80 = arith.constant 0 : index
    %240 = vector.load %arg3[%c28, %c0_80] : memref<54x128xf32, #tpu.memory_space<vmem>>, vector<1x128xf32>
    %c29 = arith.constant 29 : index
    %c0_81 = arith.constant 0 : index
    %241 = vector.load %arg3[%c29, %c0_81] : memref<54x128xf32, #tpu.memory_space<vmem>>, vector<1x128xf32>
    %242 = vector.broadcast %240 : vector<1x128xf32> to vector<16x128xf32>
    %243 = arith.mulf %24, %242 : vector<16x128xf32>
    %244 = arith.mulf %243, %158 : vector<16x128xf32>
    %245 = vector.broadcast %241 : vector<1x128xf32> to vector<16x128xf32>
    %246 = arith.mulf %33, %245 : vector<16x128xf32>
    %247 = arith.mulf %246, %167 : vector<16x128xf32>
    %248 = arith.addf %244, %247 : vector<16x128xf32>
    %c30 = arith.constant 30 : index
    %c0_82 = arith.constant 0 : index
    %249 = vector.load %arg3[%c30, %c0_82] : memref<54x128xf32, #tpu.memory_space<vmem>>, vector<1x128xf32>
    %c31 = arith.constant 31 : index
    %c0_83 = arith.constant 0 : index
    %250 = vector.load %arg3[%c31, %c0_83] : memref<54x128xf32, #tpu.memory_space<vmem>>, vector<1x128xf32>
    %251 = vector.broadcast %249 : vector<1x128xf32> to vector<16x128xf32>
    %252 = arith.mulf %27, %251 : vector<16x128xf32>
    %253 = arith.mulf %252, %167 : vector<16x128xf32>
    %254 = vector.broadcast %250 : vector<1x128xf32> to vector<16x128xf32>
    %255 = arith.mulf %36, %254 : vector<16x128xf32>
    %256 = arith.mulf %255, %176 : vector<16x128xf32>
    %257 = arith.addf %253, %256 : vector<16x128xf32>
    %c32 = arith.constant 32 : index
    %c0_84 = arith.constant 0 : index
    %258 = vector.load %arg3[%c32, %c0_84] : memref<54x128xf32, #tpu.memory_space<vmem>>, vector<1x128xf32>
    %c33 = arith.constant 33 : index
    %c0_85 = arith.constant 0 : index
    %259 = vector.load %arg3[%c33, %c0_85] : memref<54x128xf32, #tpu.memory_space<vmem>>, vector<1x128xf32>
    %260 = vector.broadcast %258 : vector<1x128xf32> to vector<16x128xf32>
    %261 = arith.mulf %30, %260 : vector<16x128xf32>
    %262 = arith.mulf %261, %176 : vector<16x128xf32>
    %263 = vector.broadcast %259 : vector<1x128xf32> to vector<16x128xf32>
    %264 = arith.mulf %39, %263 : vector<16x128xf32>
    %265 = arith.mulf %264, %185 : vector<16x128xf32>
    %266 = arith.addf %262, %265 : vector<16x128xf32>
    %c34 = arith.constant 34 : index
    %c0_86 = arith.constant 0 : index
    %267 = vector.load %arg3[%c34, %c0_86] : memref<54x128xf32, #tpu.memory_space<vmem>>, vector<1x128xf32>
    %c35 = arith.constant 35 : index
    %c0_87 = arith.constant 0 : index
    %268 = vector.load %arg3[%c35, %c0_87] : memref<54x128xf32, #tpu.memory_space<vmem>>, vector<1x128xf32>
    %269 = vector.broadcast %267 : vector<1x128xf32> to vector<16x128xf32>
    %270 = arith.mulf %33, %269 : vector<16x128xf32>
    %271 = arith.mulf %270, %185 : vector<16x128xf32>
    %272 = vector.broadcast %268 : vector<1x128xf32> to vector<16x128xf32>
    %273 = arith.mulf %42, %272 : vector<16x128xf32>
    %274 = arith.mulf %273, %194 : vector<16x128xf32>
    %275 = arith.addf %271, %274 : vector<16x128xf32>
    %c36 = arith.constant 36 : index
    %c0_88 = arith.constant 0 : index
    %276 = vector.load %arg3[%c36, %c0_88] : memref<54x128xf32, #tpu.memory_space<vmem>>, vector<1x128xf32>
    %c37 = arith.constant 37 : index
    %c0_89 = arith.constant 0 : index
    %277 = vector.load %arg3[%c37, %c0_89] : memref<54x128xf32, #tpu.memory_space<vmem>>, vector<1x128xf32>
    %278 = vector.broadcast %276 : vector<1x128xf32> to vector<16x128xf32>
    %279 = arith.mulf %36, %278 : vector<16x128xf32>
    %280 = arith.mulf %279, %194 : vector<16x128xf32>
    %281 = vector.broadcast %277 : vector<1x128xf32> to vector<16x128xf32>
    %282 = arith.mulf %45, %281 : vector<16x128xf32>
    %283 = arith.mulf %282, %203 : vector<16x128xf32>
    %284 = arith.addf %280, %283 : vector<16x128xf32>
    %c38 = arith.constant 38 : index
    %c0_90 = arith.constant 0 : index
    %285 = vector.load %arg3[%c38, %c0_90] : memref<54x128xf32, #tpu.memory_space<vmem>>, vector<1x128xf32>
    %c39 = arith.constant 39 : index
    %c0_91 = arith.constant 0 : index
    %286 = vector.load %arg3[%c39, %c0_91] : memref<54x128xf32, #tpu.memory_space<vmem>>, vector<1x128xf32>
    %287 = vector.broadcast %285 : vector<1x128xf32> to vector<16x128xf32>
    %288 = arith.mulf %12, %287 : vector<16x128xf32>
    %289 = arith.mulf %288, %212 : vector<16x128xf32>
    %290 = vector.broadcast %286 : vector<1x128xf32> to vector<16x128xf32>
    %291 = arith.mulf %24, %290 : vector<16x128xf32>
    %292 = arith.mulf %291, %221 : vector<16x128xf32>
    %293 = arith.addf %289, %292 : vector<16x128xf32>
    %c40 = arith.constant 40 : index
    %c0_92 = arith.constant 0 : index
    %294 = vector.load %arg3[%c40, %c0_92] : memref<54x128xf32, #tpu.memory_space<vmem>>, vector<1x128xf32>
    %c41 = arith.constant 41 : index
    %c0_93 = arith.constant 0 : index
    %295 = vector.load %arg3[%c41, %c0_93] : memref<54x128xf32, #tpu.memory_space<vmem>>, vector<1x128xf32>
    %296 = vector.broadcast %294 : vector<1x128xf32> to vector<16x128xf32>
    %297 = arith.mulf %15, %296 : vector<16x128xf32>
    %298 = arith.mulf %297, %221 : vector<16x128xf32>
    %299 = vector.broadcast %295 : vector<1x128xf32> to vector<16x128xf32>
    %300 = arith.mulf %27, %299 : vector<16x128xf32>
    %301 = arith.mulf %300, %230 : vector<16x128xf32>
    %302 = arith.addf %298, %301 : vector<16x128xf32>
    %c42 = arith.constant 42 : index
    %c0_94 = arith.constant 0 : index
    %303 = vector.load %arg3[%c42, %c0_94] : memref<54x128xf32, #tpu.memory_space<vmem>>, vector<1x128xf32>
    %c43 = arith.constant 43 : index
    %c0_95 = arith.constant 0 : index
    %304 = vector.load %arg3[%c43, %c0_95] : memref<54x128xf32, #tpu.memory_space<vmem>>, vector<1x128xf32>
    %305 = vector.broadcast %303 : vector<1x128xf32> to vector<16x128xf32>
    %306 = arith.mulf %18, %305 : vector<16x128xf32>
    %307 = arith.mulf %306, %230 : vector<16x128xf32>
    %308 = vector.broadcast %304 : vector<1x128xf32> to vector<16x128xf32>
    %309 = arith.mulf %30, %308 : vector<16x128xf32>
    %310 = arith.mulf %309, %239 : vector<16x128xf32>
    %311 = arith.addf %307, %310 : vector<16x128xf32>
    %c44 = arith.constant 44 : index
    %c0_96 = arith.constant 0 : index
    %312 = vector.load %arg3[%c44, %c0_96] : memref<54x128xf32, #tpu.memory_space<vmem>>, vector<1x128xf32>
    %c45 = arith.constant 45 : index
    %c0_97 = arith.constant 0 : index
    %313 = vector.load %arg3[%c45, %c0_97] : memref<54x128xf32, #tpu.memory_space<vmem>>, vector<1x128xf32>
    %314 = vector.broadcast %312 : vector<1x128xf32> to vector<16x128xf32>
    %315 = arith.mulf %21, %314 : vector<16x128xf32>
    %316 = arith.mulf %315, %239 : vector<16x128xf32>
    %317 = vector.broadcast %313 : vector<1x128xf32> to vector<16x128xf32>
    %318 = arith.mulf %33, %317 : vector<16x128xf32>
    %319 = arith.mulf %318, %248 : vector<16x128xf32>
    %320 = arith.addf %316, %319 : vector<16x128xf32>
    %c46 = arith.constant 46 : index
    %c0_98 = arith.constant 0 : index
    %321 = vector.load %arg3[%c46, %c0_98] : memref<54x128xf32, #tpu.memory_space<vmem>>, vector<1x128xf32>
    %c47 = arith.constant 47 : index
    %c0_99 = arith.constant 0 : index
    %322 = vector.load %arg3[%c47, %c0_99] : memref<54x128xf32, #tpu.memory_space<vmem>>, vector<1x128xf32>
    %323 = vector.broadcast %321 : vector<1x128xf32> to vector<16x128xf32>
    %324 = arith.mulf %24, %323 : vector<16x128xf32>
    %325 = arith.mulf %324, %248 : vector<16x128xf32>
    %326 = vector.broadcast %322 : vector<1x128xf32> to vector<16x128xf32>
    %327 = arith.mulf %36, %326 : vector<16x128xf32>
    %328 = arith.mulf %327, %257 : vector<16x128xf32>
    %329 = arith.addf %325, %328 : vector<16x128xf32>
    %c48 = arith.constant 48 : index
    %c0_100 = arith.constant 0 : index
    %330 = vector.load %arg3[%c48, %c0_100] : memref<54x128xf32, #tpu.memory_space<vmem>>, vector<1x128xf32>
    %c49 = arith.constant 49 : index
    %c0_101 = arith.constant 0 : index
    %331 = vector.load %arg3[%c49, %c0_101] : memref<54x128xf32, #tpu.memory_space<vmem>>, vector<1x128xf32>
    %332 = vector.broadcast %330 : vector<1x128xf32> to vector<16x128xf32>
    %333 = arith.mulf %27, %332 : vector<16x128xf32>
    %334 = arith.mulf %333, %257 : vector<16x128xf32>
    %335 = vector.broadcast %331 : vector<1x128xf32> to vector<16x128xf32>
    %336 = arith.mulf %39, %335 : vector<16x128xf32>
    %337 = arith.mulf %336, %266 : vector<16x128xf32>
    %338 = arith.addf %334, %337 : vector<16x128xf32>
    %c50 = arith.constant 50 : index
    %c0_102 = arith.constant 0 : index
    %339 = vector.load %arg3[%c50, %c0_102] : memref<54x128xf32, #tpu.memory_space<vmem>>, vector<1x128xf32>
    %c51 = arith.constant 51 : index
    %c0_103 = arith.constant 0 : index
    %340 = vector.load %arg3[%c51, %c0_103] : memref<54x128xf32, #tpu.memory_space<vmem>>, vector<1x128xf32>
    %341 = vector.broadcast %339 : vector<1x128xf32> to vector<16x128xf32>
    %342 = arith.mulf %30, %341 : vector<16x128xf32>
    %343 = arith.mulf %342, %266 : vector<16x128xf32>
    %344 = vector.broadcast %340 : vector<1x128xf32> to vector<16x128xf32>
    %345 = arith.mulf %42, %344 : vector<16x128xf32>
    %346 = arith.mulf %345, %275 : vector<16x128xf32>
    %347 = arith.addf %343, %346 : vector<16x128xf32>
    %c52 = arith.constant 52 : index
    %c0_104 = arith.constant 0 : index
    %348 = vector.load %arg3[%c52, %c0_104] : memref<54x128xf32, #tpu.memory_space<vmem>>, vector<1x128xf32>
    %c53 = arith.constant 53 : index
    %c0_105 = arith.constant 0 : index
    %349 = vector.load %arg3[%c53, %c0_105] : memref<54x128xf32, #tpu.memory_space<vmem>>, vector<1x128xf32>
    %350 = vector.broadcast %348 : vector<1x128xf32> to vector<16x128xf32>
    %351 = arith.mulf %33, %350 : vector<16x128xf32>
    %352 = arith.mulf %351, %275 : vector<16x128xf32>
    %353 = vector.broadcast %349 : vector<1x128xf32> to vector<16x128xf32>
    %354 = arith.mulf %45, %353 : vector<16x128xf32>
    %355 = arith.mulf %354, %284 : vector<16x128xf32>
    %356 = arith.addf %352, %355 : vector<16x128xf32>
    %357 = arith.truncf %293 : vector<16x128xf32> to vector<16x128xbf16>
    %c0_106 = arith.constant 0 : index
    %c128 = arith.constant 128 : index
    %358 = vector.load %arg6[%c0_106, %c128] : memref<16x1152xbf16, #tpu.memory_space<vmem>>, vector<16x128xbf16>
    tpu.vector_store %arg6[%c0_106, %c128], %357 {strides = array<i32>} : memref<16x1152xbf16, #tpu.memory_space<vmem>>, vector<16x128xbf16>,
    %359 = arith.truncf %302 : vector<16x128xf32> to vector<16x128xbf16>
    %c0_107 = arith.constant 0 : index
    %c256 = arith.constant 256 : index
    %360 = vector.load %arg6[%c0_107, %c256] : memref<16x1152xbf16, #tpu.memory_space<vmem>>, vector<16x128xbf16>
    tpu.vector_store %arg6[%c0_107, %c256], %359 {strides = array<i32>} : memref<16x1152xbf16, #tpu.memory_space<vmem>>, vector<16x128xbf16>,
    %361 = arith.truncf %311 : vector<16x128xf32> to vector<16x128xbf16>
    %c0_108 = arith.constant 0 : index
    %c384 = arith.constant 384 : index
    %362 = vector.load %arg6[%c0_108, %c384] : memref<16x1152xbf16, #tpu.memory_space<vmem>>, vector<16x128xbf16>
    tpu.vector_store %arg6[%c0_108, %c384], %361 {strides = array<i32>} : memref<16x1152xbf16, #tpu.memory_space<vmem>>, vector<16x128xbf16>,
    %363 = arith.truncf %320 : vector<16x128xf32> to vector<16x128xbf16>
    %c0_109 = arith.constant 0 : index
    %c512 = arith.constant 512 : index
    %364 = vector.load %arg6[%c0_109, %c512] : memref<16x1152xbf16, #tpu.memory_space<vmem>>, vector<16x128xbf16>
    tpu.vector_store %arg6[%c0_109, %c512], %363 {strides = array<i32>} : memref<16x1152xbf16, #tpu.memory_space<vmem>>, vector<16x128xbf16>,
    %365 = arith.truncf %329 : vector<16x128xf32> to vector<16x128xbf16>
    %c0_110 = arith.constant 0 : index
    %c640 = arith.constant 640 : index
    %366 = vector.load %arg6[%c0_110, %c640] : memref<16x1152xbf16, #tpu.memory_space<vmem>>, vector<16x128xbf16>
    tpu.vector_store %arg6[%c0_110, %c640], %365 {strides = array<i32>} : memref<16x1152xbf16, #tpu.memory_space<vmem>>, vector<16x128xbf16>,
    %367 = arith.truncf %338 : vector<16x128xf32> to vector<16x128xbf16>
    %c0_111 = arith.constant 0 : index
    %c768 = arith.constant 768 : index
    %368 = vector.load %arg6[%c0_111, %c768] : memref<16x1152xbf16, #tpu.memory_space<vmem>>, vector<16x128xbf16>
    tpu.vector_store %arg6[%c0_111, %c768], %367 {strides = array<i32>} : memref<16x1152xbf16, #tpu.memory_space<vmem>>, vector<16x128xbf16>,
    %369 = arith.truncf %347 : vector<16x128xf32> to vector<16x128xbf16>
    %c0_112 = arith.constant 0 : index
    %c896 = arith.constant 896 : index
    %370 = vector.load %arg6[%c0_112, %c896] : memref<16x1152xbf16, #tpu.memory_space<vmem>>, vector<16x128xbf16>
    tpu.vector_store %arg6[%c0_112, %c896], %369 {strides = array<i32>} : memref<16x1152xbf16, #tpu.memory_space<vmem>>, vector<16x128xbf16>,
    %371 = arith.truncf %356 : vector<16x128xf32> to vector<16x128xbf16>
    %c0_113 = arith.constant 0 : index
    %c1024 = arith.constant 1024 : index
    %372 = vector.load %arg6[%c0_113, %c1024] : memref<16x1152xbf16, #tpu.memory_space<vmem>>, vector<16x128xbf16>
    tpu.vector_store %arg6[%c0_113, %c1024], %371 {strides = array<i32>} : memref<16x1152xbf16, #tpu.memory_space<vmem>>, vector<16x128xbf16>,
    %c0_114 = arith.constant 0 : index
    %c0_115 = arith.constant 0 : index
    %373 = vector.load %arg6[%c0_114, %c0_115] : memref<16x1152xbf16, #tpu.memory_space<vmem>>, vector<16x1152xbf16>
    %c0_116 = arith.constant 0 : index
    %c0_117 = arith.constant 0 : index
    %374 = vector.load %arg4[%c0_116, %c0_117] : memref<1152x128xbf16, #tpu.memory_space<vmem>>, vector<1152x128xbf16>
    %cst_118 = arith.constant dense<0.000000e+00> : vector<16x128xf32>
    %375 = tpu.matmul %373, %374, %cst_118 {dimension_numbers = #tpu.dot_dimension_numbers<[1], [0], [0], [1], [0, 0, 1, 1], [], []>} : vector<16x1152xbf16>, vector<1152x128xbf16>, vector<16x128xf32> -> vector<16x128xf32>
    %c0_119 = arith.constant 0 : index
    %c0_120 = arith.constant 0 : index
    %376 = vector.load %arg5[%c0_119, %c0_120] : memref<16x128xf32, #tpu.memory_space<vmem>>, vector<16x128xf32>
    tpu.vector_store %arg5[%c0_119, %c0_120], %375 {strides = array<i32>} : memref<16x128xf32, #tpu.memory_space<vmem>>, vector<16x128xf32>,
    return
  }
  func.func @transform_0(%arg0: i32) -> (i32, i32) {
    %c0_i32 = arith.constant 0 : i32
    %c0_i32_0 = arith.constant 0 : i32
    return %arg0, %c0_i32 : i32, i32
  }
  func.func @transform_1(%arg0: i32) -> (i32, i32) {
    %c0_i32 = arith.constant 0 : i32
    %c0_i32_0 = arith.constant 0 : i32
    %c0_i32_1 = arith.constant 0 : i32
    return %c0_i32, %c0_i32_0 : i32, i32
  }
  func.func @transform_2(%arg0: i32) -> (i32, i32) {
    %c0_i32 = arith.constant 0 : i32
    %c0_i32_0 = arith.constant 0 : i32
    %c0_i32_1 = arith.constant 0 : i32
    return %c0_i32, %c0_i32_0 : i32, i32
  }
  func.func @transform_3(%arg0: i32) -> (i32, i32) {
    %c0_i32 = arith.constant 0 : i32
    %c0_i32_0 = arith.constant 0 : i32
    %c0_i32_1 = arith.constant 0 : i32
    return %c0_i32, %c0_i32_0 : i32, i32
  }
  func.func @transform_4(%arg0: i32) -> (i32, i32) {
    %c0_i32 = arith.constant 0 : i32
    %c0_i32_0 = arith.constant 0 : i32
    return %arg0, %c0_i32 : i32, i32
  }
}

</mosaic_0001>

<llo_original>
// kernel: tpu_custom_call.1
$region0: #{tpu_custom_call.1}
  #allocation0 [shape = 'u32[]', space=smem, size = 0x4, offset = 0x4, fixed_abs, tag = 'smem constant byte address 0x4 - core index']
  #allocation1 [shape = 'u32[144,128]{1,0:T(1,128)}', space=vmem, size = 0x12000, scoped, tag = 'internal scratch']
  #allocation2 [shape = 'bf16[16,1152]{1,0:T(16,128)(2,1)}', space=vmem, size = 0x9000, scoped, tag = 'scratch operand']
  %s0 = inlined_call_operand.hbm [shape: f32[16,128], index: 0, kind: input, shape index: {}]
  %s1 = inlined_call_operand.hbm [shape: f32[12,128], index: 1, kind: input, shape index: {}]
  %s2 = inlined_call_operand.hbm [shape: f32[54,128], index: 2, kind: input, shape index: {}]
  %s3 = inlined_call_operand.hbm [shape: bf16[1152,128], index: 3, kind: input, shape index: {}]
  %s4 = inlined_call_operand.hbm [shape: f32[16,128], index: 4, kind: output, shape index: {}]
  %s5 = sld [smem:[#allocation0]]
  $region42: #{tpu_custom_call.1} parent=0
    _
  %s7 = ssub.s32 1, %s5
  %s8 = scalar_select 0, %s7, %s5
  $region1: #{tpu_custom_call.1} parent=0
    #allocation3 [shape = 'u8[8192]{0}', space=vmem, size = 0x2000, scoped, tag = 'input window, operand 0, single buffered']
    #allocation4 [shape = 's32[1]{0}', space=sflag, size = 0x4, scoped, tag = 'scoped memory for tpu_custom_call.1']
    #allocation5 [shape = 's32[1]{0}', space=sflag, size = 0x4, scoped, tag = 'scoped memory for tpu_custom_call.1']
    #allocation6 [shape = 'u8[8192]{0}', space=vmem, size = 0x2000, scoped, tag = 'input window, operand 1, single buffered']
    #allocation7 [shape = 's32[1]{0}', space=sflag, size = 0x4, scoped, tag = 'scoped memory for tpu_custom_call.1']
    #allocation8 [shape = 'u8[28672]{0}', space=vmem, size = 0x7000, scoped, tag = 'input window, operand 2, single buffered']
    #allocation9 [shape = 'u8[294912]{0}', space=vmem, size = 0x48000, scoped, tag = 'input window, operand 3, single buffered']
    #allocation10 [shape = 's32[1]{0}', space=sflag, size = 0x4, scoped, tag = 'scoped memory for tpu_custom_call.1']
    #allocation11 [shape = 'u8[8192]{0}', space=vmem, size = 0x2000, scoped, tag = 'output window, operand 0, single buffered']
    %9 = vsyncpa [#allocation4], 0
    %10 = vsyncpa [#allocation7], 0
    %11 = vsyncpa [#allocation10], 0
    %12 = vsyncpa [#allocation5], 0
    // Predicated region
    $region2: #{tpu_custom_call.1} parent=1 // pred_check
      _
    $region3: #{tpu_custom_call.1} parent=1 // pred_check_branch
      %14 = sbr.rel (0) target = $region5
    $region4: #{tpu_custom_call.1} parent=1 // pred_region
      %s16 = ssub.s32 256, 256
      %17 = vsyncadd [#allocation4], %s16
      %s18 = sshll.u32 [#allocation3], 4
      %s19 = int_to_ptr.vmem [resolvable:$true] %s18
      %24 = dma.hbm_to_vmem [thread:$0]  %s0, 256, %s19, [#allocation4], 128, 128, 8
    $region5: #{tpu_custom_call.1} parent=1 // pred_fallthru
      _
    // Predicated region
    $region6: #{tpu_custom_call.1} parent=1 // pred_check
      _
    $region7: #{tpu_custom_call.1} parent=1 // pred_check_branch
      %26 = sbr.rel (0) target = $region9
    $region8: #{tpu_custom_call.1} parent=1 // pred_region
      %s28 = ssub.s32 256, 256
      %29 = vsyncadd [#allocation7], %s28
      %s30 = sshll.u32 [#allocation6], 4
      %s31 = int_to_ptr.vmem [resolvable:$true] %s30
      %36 = dma.hbm_to_vmem [thread:$0]  %s1, 256, %s31, [#allocation7], 128, 128, 8
    $region9: #{tpu_custom_call.1} parent=1 // pred_fallthru
      _
    // Predicated region
    $region10: #{tpu_custom_call.1} parent=1 // pred_check
      _
    $region11: #{tpu_custom_call.1} parent=1 // pred_check_branch
      %38 = sbr.rel (0) target = $region13
    $region12: #{tpu_custom_call.1} parent=1 // pred_region
      %s40 = ssub.s32 896, 896
      %41 = vsyncadd [#allocation7], %s40
      %s42 = sshll.u32 [#allocation8], 4
      %s43 = int_to_ptr.vmem [resolvable:$true] %s42
      %48 = dma.hbm_to_vmem [thread:$0]  %s2, 896, %s43, [#allocation7], 128, 128, 8
    $region13: #{tpu_custom_call.1} parent=1 // pred_fallthru
      _
    // Predicated region
    $region14: #{tpu_custom_call.1} parent=1 // pred_check
      _
    $region15: #{tpu_custom_call.1} parent=1 // pred_check_branch
      %50 = sbr.rel (0) target = $region17
    $region16: #{tpu_custom_call.1} parent=1 // pred_region
      %s52 = ssub.s32 9216, 9216
      %53 = vsyncadd [#allocation10], %s52
      %s54 = sshll.u32 [#allocation9], 4
      %s55 = int_to_ptr.vmem [resolvable:$true] %s54
      %60 = dma.hbm_to_vmem [thread:$0]  %s3, 9216, %s55, [#allocation10], 64, 64, 4
    $region17: #{tpu_custom_call.1} parent=1 // pred_fallthru
      _
    // Predicated region
    $region18: #{tpu_custom_call.1} parent=1 // pred_check
      _
    $region19: #{tpu_custom_call.1} parent=1 // pred_check_branch
      %62 = sbr.rel (0) target = $region21
    $region20: #{tpu_custom_call.1} parent=1 // pred_region
      %63 = dma.done [#allocation4], 256
    $region21: #{tpu_custom_call.1} parent=1 // pred_fallthru
      _
    // Predicated region
    $region22: #{tpu_custom_call.1} parent=1 // pred_check
      _
    $region23: #{tpu_custom_call.1} parent=1 // pred_check_branch
      %65 = sbr.rel (0) target = $region25
    $region24: #{tpu_custom_call.1} parent=1 // pred_region
      %66 = dma.done [#allocation7], 256
    $region25: #{tpu_custom_call.1} parent=1 // pred_fallthru
      _
    // Predicated region
    $region26: #{tpu_custom_call.1} parent=1 // pred_check
      _
    $region27: #{tpu_custom_call.1} parent=1 // pred_check_branch
      %68 = sbr.rel (0) target = $region29
    $region28: #{tpu_custom_call.1} parent=1 // pred_region
      %69 = dma.done [#allocation7], 896
    $region29: #{tpu_custom_call.1} parent=1 // pred_fallthru
      _
    // Predicated region
    $region30: #{tpu_custom_call.1} parent=1 // pred_check
      _
    $region31: #{tpu_custom_call.1} parent=1 // pred_check_branch
      %71 = sbr.rel (0) target = $region33
    $region32: #{tpu_custom_call.1} parent=1 // pred_region
      %72 = dma.done [#allocation10], 9216
    $region33: #{tpu_custom_call.1} parent=1 // pred_fallthru
      _
    %v74 = vld [vmem:[#allocation3] sm:$0xff]
    %v75 = vld [vmem:[#allocation3 + $0x8] sm:$0xff]
    %v76 = vsub.f32 0.0, %v74
    %v77 = vsub.f32 0.0, %v75
    %v78 = vmul.f32 %v76, 1.442695
    %v79 = vpow.pop %v78
    %v80 = vmul.f32 %v77, 1.442695
    %v81 = vpow.pop %v80
    %v82 = vadd.f32 %v79, 1.0
    %v83 = vadd.f32 %v81, 1.0
    %v84 = vrcp.pop %v82
    %v85 = vrcp.pop %v83
    %v86 = vmul.f32 %v74, %v84
    %v87 = vmul.f32 %v75, %v85
    %v88 = vpack.c.bf16 %v87, %v86
    %89 = vst [vmem:[#allocation2] sm:$0xff] %v88
    %v90 = vld [vmem:[#allocation6] sm:$0x1]
    %v91 = vlaneseq
    %v92 = vshrl.u32 %v91, 7
    %v93 = vsub.s32 0, %v92
    %v94 = vrot.slane %v90, %v93
    %v95 = vsub.f32 %v74, %v94
    %v96 = vsub.f32 %v75, %v94
    %v97 = vld [vmem:[#allocation6 + $0x1] sm:$0x1]
    %v98 = vlaneseq
    %v99 = vshrl.u32 %v98, 7
    %v100 = vsub.s32 0, %v99
    %v101 = vrot.slane %v97, %v100
    %v102 = vsub.f32 %v74, %v101
    %v103 = vsub.f32 %v75, %v101
    %v104 = vld [vmem:[#allocation6 + $0x2] sm:$0x1]
    %v105 = vlaneseq
    %v106 = vshrl.u32 %v105, 7
    %v107 = vsub.s32 0, %v106
    %v108 = vrot.slane %v104, %v107
    %v109 = vsub.f32 %v74, %v108
    %v110 = vsub.f32 %v75, %v108
    %v111 = vld [vmem:[#allocation6 + $0x3] sm:$0x1]
    %v112 = vlaneseq
    %v113 = vshrl.u32 %v112, 7
    %v114 = vsub.s32 0, %v113
    %v115 = vrot.slane %v111, %v114
    %v116 = vsub.f32 %v74, %v115
    %v117 = vsub.f32 %v75, %v115
    %v118 = vld [vmem:[#allocation6 + $0x4] sm:$0x1]
    %v119 = vlaneseq
    %v120 = vshrl.u32 %v119, 7
    %v121 = vsub.s32 0, %v120
    %v122 = vrot.slane %v118, %v121
    %v123 = vsub.f32 %v74, %v122
    %v124 = vsub.f32 %v75, %v122
    %v125 = vld [vmem:[#allocation6 + $0x5] sm:$0x1]
    %v126 = vlaneseq
    %v127 = vshrl.u32 %v126, 7
    %v128 = vsub.s32 0, %v127
    %v129 = vrot.slane %v125, %v128
    %v130 = vsub.f32 %v74, %v129
    %v131 = vsub.f32 %v75, %v129
    %v132 = vld [vmem:[#allocation6 + $0x6] sm:$0x1]
    %v133 = vlaneseq
    %v134 = vshrl.u32 %v133, 7
    %v135 = vsub.s32 0, %v134
    %v136 = vrot.slane %v132, %v135
    %v137 = vsub.f32 %v74, %v136
    %v138 = vsub.f32 %v75, %v136
    %v139 = vld [vmem:[#allocation6 + $0x7] sm:$0x1]
    %v140 = vlaneseq
    %v141 = vshrl.u32 %v140, 7
    %v142 = vsub.s32 0, %v141
    %v143 = vrot.slane %v139, %v142
    %v144 = vsub.f32 %v74, %v143
    %v145 = vsub.f32 %v75, %v143
    %v146 = vld [vmem:[#allocation6 + $0x8] sm:$0x1]
    %v147 = vlaneseq
    %v148 = vshrl.u32 %v147, 7
    %v149 = vsub.s32 0, %v148
    %v150 = vrot.slane %v146, %v149
    %v151 = vsub.f32 %v74, %v150
    %v152 = vsub.f32 %v75, %v150
    %v153 = vld [vmem:[#allocation6 + $0x9] sm:$0x1]
    %v154 = vlaneseq
    %v155 = vshrl.u32 %v154, 7
    %v156 = vsub.s32 0, %v155
    %v157 = vrot.slane %v153, %v156
    %v158 = vsub.f32 %v74, %v157
    %v159 = vsub.f32 %v75, %v157
    %v160 = vld [vmem:[#allocation6 + $0xa] sm:$0x1]
    %v161 = vlaneseq
    %v162 = vshrl.u32 %v161, 7
    %v163 = vsub.s32 0, %v162
    %v164 = vrot.slane %v160, %v163
    %v165 = vsub.f32 %v74, %v164
    %v166 = vsub.f32 %v75, %v164
    %v167 = vld [vmem:[#allocation6 + $0xb] sm:$0x1]
    %v168 = vlaneseq
    %v169 = vshrl.u32 %v168, 7
    %v170 = vsub.s32 0, %v169
    %v171 = vrot.slane %v167, %v170
    %v172 = vsub.f32 %v74, %v171
    %v173 = vsub.f32 %v75, %v171
    %vm174 = vcmp.ge.f32.partialorder %v95, 0.0
    %vm175 = vcmp.ge.f32.partialorder %v96, 0.0
    %vm176 = vcmp.ge.f32.partialorder %v102, 0.0
    %vm177 = vcmp.ge.f32.partialorder %v103, 0.0
    %vm178 = vcmp.ge.f32.partialorder %v109, 0.0
    %vm179 = vcmp.ge.f32.partialorder %v110, 0.0
    %vm180 = vcmp.ge.f32.partialorder %v116, 0.0
    %vm181 = vcmp.ge.f32.partialorder %v117, 0.0
    %vm182 = vcmp.ge.f32.partialorder %v123, 0.0
    %vm183 = vcmp.ge.f32.partialorder %v124, 0.0
    %vm184 = vcmp.ge.f32.partialorder %v130, 0.0
    %vm185 = vcmp.ge.f32.partialorder %v131, 0.0
    %vm186 = vcmp.ge.f32.partialorder %v137, 0.0
    %vm187 = vcmp.ge.f32.partialorder %v138, 0.0
    %vm188 = vcmp.ge.f32.partialorder %v144, 0.0
    %vm189 = vcmp.ge.f32.partialorder %v145, 0.0
    %vm190 = vcmp.ge.f32.partialorder %v151, 0.0
    %vm191 = vcmp.ge.f32.partialorder %v152, 0.0
    %vm192 = vcmp.ge.f32.partialorder %v158, 0.0
    %vm193 = vcmp.ge.f32.partialorder %v159, 0.0
    %vm194 = vcmp.ge.f32.partialorder %v165, 0.0
    %vm195 = vcmp.ge.f32.partialorder %v166, 0.0
    %vm196 = vcmp.ge.f32.partialorder %v172, 0.0
    %vm197 = vcmp.ge.f32.partialorder %v173, 0.0
    %vm198 = vmxor %vm176, 1
    %vm199 = vmxor %vm177, 1
    %vm200 = vmand %vm174, %vm198
    %vm201 = vmand %vm175, %vm199
    %v202 = vsel %vm200, 1, 0
    %v203 = vsel %vm201, 1, 0
    %v204 = vcvt.s32.f32 %v202
    %v205 = vcvt.s32.f32 %v203
    %vm206 = vmxor %vm178, 1
    %vm207 = vmxor %vm179, 1
    %vm208 = vmand %vm176, %vm206
    %vm209 = vmand %vm177, %vm207
    %v210 = vsel %vm208, 1, 0
    %v211 = vsel %vm209, 1, 0
    %v212 = vcvt.s32.f32 %v210
    %v213 = vcvt.s32.f32 %v211
    %vm214 = vmxor %vm180, 1
    %vm215 = vmxor %vm181, 1
    %vm216 = vmand %vm178, %vm214
    %vm217 = vmand %vm179, %vm215
    %v218 = vsel %vm216, 1, 0
    %v219 = vsel %vm217, 1, 0
    %v220 = vcvt.s32.f32 %v218
    %v221 = vcvt.s32.f32 %v219
    %vm222 = vmxor %vm182, 1
    %vm223 = vmxor %vm183, 1
    %vm224 = vmand %vm180, %vm222
    %vm225 = vmand %vm181, %vm223
    %v226 = vsel %vm224, 1, 0
    %v227 = vsel %vm225, 1, 0
    %v228 = vcvt.s32.f32 %v226
    %v229 = vcvt.s32.f32 %v227
    %vm230 = vmxor %vm184, 1
    %vm231 = vmxor %vm185, 1
    %vm232 = vmand %vm182, %vm230
    %vm233 = vmand %vm183, %vm231
    %v234 = vsel %vm232, 1, 0
    %v235 = vsel %vm233, 1, 0
    %v236 = vcvt.s32.f32 %v234
    %v237 = vcvt.s32.f32 %v235
    %vm238 = vmxor %vm186, 1
    %vm239 = vmxor %vm187, 1
    %vm240 = vmand %vm184, %vm238
    %vm241 = vmand %vm185, %vm239
    %v242 = vsel %vm240, 1, 0
    %v243 = vsel %vm241, 1, 0
    %v244 = vcvt.s32.f32 %v242
    %v245 = vcvt.s32.f32 %v243
    %vm246 = vmxor %vm188, 1
    %vm247 = vmxor %vm189, 1
    %vm248 = vmand %vm186, %vm246
    %vm249 = vmand %vm187, %vm247
    %v250 = vsel %vm248, 1, 0
    %v251 = vsel %vm249, 1, 0
    %v252 = vcvt.s32.f32 %v250
    %v253 = vcvt.s32.f32 %v251
    %vm254 = vmxor %vm190, 1
    %vm255 = vmxor %vm191, 1
    %vm256 = vmand %vm188, %vm254
    %vm257 = vmand %vm189, %vm255
    %v258 = vsel %vm256, 1, 0
    %v259 = vsel %vm257, 1, 0
    %v260 = vcvt.s32.f32 %v258
    %v261 = vcvt.s32.f32 %v259
    %vm262 = vmxor %vm192, 1
    %vm263 = vmxor %vm193, 1
    %vm264 = vmand %vm190, %vm262
    %vm265 = vmand %vm191, %vm263
    %v266 = vsel %vm264, 1, 0
    %v267 = vsel %vm265, 1, 0
    %v268 = vcvt.s32.f32 %v266
    %v269 = vcvt.s32.f32 %v267
    %vm270 = vmxor %vm194, 1
    %vm271 = vmxor %vm195, 1
    %vm272 = vmand %vm192, %vm270
    %vm273 = vmand %vm193, %vm271
    %v274 = vsel %vm272, 1, 0
    %v275 = vsel %vm273, 1, 0
    %v276 = vcvt.s32.f32 %v274
    %v277 = vcvt.s32.f32 %v275
    %vm278 = vmxor %vm196, 1
    %vm279 = vmxor %vm197, 1
    %vm280 = vmand %vm194, %vm278
    %vm281 = vmand %vm195, %vm279
    %v282 = vsel %vm280, 1, 0
    %v283 = vsel %vm281, 1, 0
    %v284 = vcvt.s32.f32 %v282
    %v285 = vcvt.s32.f32 %v283
    %v286 = vld [vmem:[#allocation8] sm:$0x1]
    %v287 = vld [vmem:[#allocation8 + $0x1] sm:$0x1]
    %v288 = vlaneseq
    %v289 = vshrl.u32 %v288, 7
    %v290 = vsub.s32 0, %v289
    %v291 = vrot.slane %v286, %v290
    %v292 = vmul.f32 %v95, %v291
    %v293 = vmul.f32 %v96, %v291
    %v294 = vmul.f32 %v292, %v204
    %v295 = vmul.f32 %v293, %v205
    %v296 = vlaneseq
    %v297 = vshrl.u32 %v296, 7
    %v298 = vsub.s32 0, %v297
    %v299 = vrot.slane %v287, %v298
    %v300 = vmul.f32 %v109, %v299
    %v301 = vmul.f32 %v110, %v299
    %v302 = vmul.f32 %v300, %v212
    %v303 = vmul.f32 %v301, %v213
    %v304 = vadd.f32 %v294, %v302
    %v305 = vadd.f32 %v295, %v303
    %v306 = vld [vmem:[#allocation8 + $0x2] sm:$0x1]
    %v307 = vld [vmem:[#allocation8 + $0x3] sm:$0x1]
    %v308 = vlaneseq
    %v309 = vshrl.u32 %v308, 7
    %v310 = vsub.s32 0, %v309
    %v311 = vrot.slane %v306, %v310
    %v312 = vmul.f32 %v102, %v311
    %v313 = vmul.f32 %v103, %v311
    %v314 = vmul.f32 %v312, %v212
    %v315 = vmul.f32 %v313, %v213
    %v316 = vlaneseq
    %v317 = vshrl.u32 %v316, 7
    %v318 = vsub.s32 0, %v317
    %v319 = vrot.slane %v307, %v318
    %v320 = vmul.f32 %v116, %v319
    %v321 = vmul.f32 %v117, %v319
    %v322 = vmul.f32 %v320, %v220
    %v323 = vmul.f32 %v321, %v221
    %v324 = vadd.f32 %v314, %v322
    %v325 = vadd.f32 %v315, %v323
    %v326 = vld [vmem:[#allocation8 + $0x4] sm:$0x1]
    %v327 = vld [vmem:[#allocation8 + $0x5] sm:$0x1]
    %v328 = vlaneseq
    %v329 = vshrl.u32 %v328, 7
    %v330 = vsub.s32 0, %v329
    %v331 = vrot.slane %v326, %v330
    %v332 = vmul.f32 %v109, %v331
    %v333 = vmul.f32 %v110, %v331
    %v334 = vmul.f32 %v332, %v220
    %v335 = vmul.f32 %v333, %v221
    %v336 = vlaneseq
    %v337 = vshrl.u32 %v336, 7
    %v338 = vsub.s32 0, %v337
    %v339 = vrot.slane %v327, %v338
    %v340 = vmul.f32 %v123, %v339
    %v341 = vmul.f32 %v124, %v339
    %v342 = vmul.f32 %v340, %v228
    %v343 = vmul.f32 %v341, %v229
    %v344 = vadd.f32 %v334, %v342
    %v345 = vadd.f32 %v335, %v343
    %v346 = vld [vmem:[#allocation8 + $0x6] sm:$0x1]
    %v347 = vld [vmem:[#allocation8 + $0x7] sm:$0x1]
    %v348 = vlaneseq
    %v349 = vshrl.u32 %v348, 7
    %v350 = vsub.s32 0, %v349
    %v351 = vrot.slane %v346, %v350
    %v352 = vmul.f32 %v116, %v351
    %v353 = vmul.f32 %v117, %v351
    %v354 = vmul.f32 %v352, %v228
    %v355 = vmul.f32 %v353, %v229
    %v356 = vlaneseq
    %v357 = vshrl.u32 %v356, 7
    %v358 = vsub.s32 0, %v357
    %v359 = vrot.slane %v347, %v358
    %v360 = vmul.f32 %v130, %v359
    %v361 = vmul.f32 %v131, %v359
    %v362 = vmul.f32 %v360, %v236
    %v363 = vmul.f32 %v361, %v237
    %v364 = vadd.f32 %v354, %v362
    %v365 = vadd.f32 %v355, %v363
    %v366 = vld [vmem:[#allocation8 + $0x8] sm:$0x1]
    %v367 = vld [vmem:[#allocation8 + $0x9] sm:$0x1]
    %v368 = vlaneseq
    %v369 = vshrl.u32 %v368, 7
    %v370 = vsub.s32 0, %v369
    %v371 = vrot.slane %v366, %v370
    %v372 = vmul.f32 %v123, %v371
    %v373 = vmul.f32 %v124, %v371
    %v374 = vmul.f32 %v372, %v236
    %v375 = vmul.f32 %v373, %v237
    %v376 = vlaneseq
    %v377 = vshrl.u32 %v376, 7
    %v378 = vsub.s32 0, %v377
    %v379 = vrot.slane %v367, %v378
    %v380 = vmul.f32 %v137, %v379
    %v381 = vmul.f32 %v138, %v379
    %v382 = vmul.f32 %v380, %v244
    %v383 = vmul.f32 %v381, %v245
    %v384 = vadd.f32 %v374, %v382
    %v385 = vadd.f32 %v375, %v383
    %v386 = vld [vmem:[#allocation8 + $0xa] sm:$0x1]
    %v387 = vld [vmem:[#allocation8 + $0xb] sm:$0x1]
    %v388 = vlaneseq
    %v389 = vshrl.u32 %v388, 7
    %v390 = vsub.s32 0, %v389
    %v391 = vrot.slane %v386, %v390
    %v392 = vmul.f32 %v130, %v391
    %v393 = vmul.f32 %v131, %v391
    %v394 = vmul.f32 %v392, %v244
    %v395 = vmul.f32 %v393, %v245
    %v396 = vlaneseq
    %v397 = vshrl.u32 %v396, 7
    %v398 = vsub.s32 0, %v397
    %v399 = vrot.slane %v387, %v398
    %v400 = vmul.f32 %v144, %v399
    %v401 = vmul.f32 %v145, %v399
    %v402 = vmul.f32 %v400, %v252
    %v403 = vmul.f32 %v401, %v253
    %v404 = vadd.f32 %v394, %v402
    %v405 = vadd.f32 %v395, %v403
    %v406 = vld [vmem:[#allocation8 + $0xc] sm:$0x1]
    %v407 = vld [vmem:[#allocation8 + $0xd] sm:$0x1]
    %v408 = vlaneseq
    %v409 = vshrl.u32 %v408, 7
    %v410 = vsub.s32 0, %v409
    %v411 = vrot.slane %v406, %v410
    %v412 = vmul.f32 %v137, %v411
    %v413 = vmul.f32 %v138, %v411
    %v414 = vmul.f32 %v412, %v252
    %v415 = vmul.f32 %v413, %v253
    %v416 = vlaneseq
    %v417 = vshrl.u32 %v416, 7
    %v418 = vsub.s32 0, %v417
    %v419 = vrot.slane %v407, %v418
    %v420 = vmul.f32 %v151, %v419
    %v421 = vmul.f32 %v152, %v419
    %v422 = vmul.f32 %v420, %v260
    %v423 = vmul.f32 %v421, %v261
    %v424 = vadd.f32 %v414, %v422
    %v425 = vadd.f32 %v415, %v423
    %v426 = vld [vmem:[#allocation8 + $0xe] sm:$0x1]
    %v427 = vld [vmem:[#allocation8 + $0xf] sm:$0x1]
    %v428 = vlaneseq
    %v429 = vshrl.u32 %v428, 7
    %v430 = vsub.s32 0, %v429
    %v431 = vrot.slane %v426, %v430
    %v432 = vmul.f32 %v144, %v431
    %v433 = vmul.f32 %v145, %v431
    %v434 = vmul.f32 %v432, %v260
    %v435 = vmul.f32 %v433, %v261
    %v436 = vlaneseq
    %v437 = vshrl.u32 %v436, 7
    %v438 = vsub.s32 0, %v437
    %v439 = vrot.slane %v427, %v438
    %v440 = vmul.f32 %v158, %v439
    %v441 = vmul.f32 %v159, %v439
    %v442 = vmul.f32 %v440, %v268
    %v443 = vmul.f32 %v441, %v269
    %v444 = vadd.f32 %v434, %v442
    %v445 = vadd.f32 %v435, %v443
    %v446 = vld [vmem:[#allocation8 + $0x10] sm:$0x1]
    %v447 = vld [vmem:[#allocation8 + $0x11] sm:$0x1]
    %v448 = vlaneseq
    %v449 = vshrl.u32 %v448, 7
    %v450 = vsub.s32 0, %v449
    %v451 = vrot.slane %v446, %v450
    %v452 = vmul.f32 %v151, %v451
    %v453 = vmul.f32 %v152, %v451
    %v454 = vmul.f32 %v452, %v268
    %v455 = vmul.f32 %v453, %v269
    %v456 = vlaneseq
    %v457 = vshrl.u32 %v456, 7
    %v458 = vsub.s32 0, %v457
    %v459 = vrot.slane %v447, %v458
    %v460 = vmul.f32 %v165, %v459
    %v461 = vmul.f32 %v166, %v459
    %v462 = vmul.f32 %v460, %v276
    %v463 = vmul.f32 %v461, %v277
    %v464 = vadd.f32 %v454, %v462
    %v465 = vadd.f32 %v455, %v463
    %v466 = vld [vmem:[#allocation8 + $0x12] sm:$0x1]
    %v467 = vld [vmem:[#allocation8 + $0x13] sm:$0x1]
    %v468 = vlaneseq
    %v469 = vshrl.u32 %v468, 7
    %v470 = vsub.s32 0, %v469
    %v471 = vrot.slane %v466, %v470
    %v472 = vmul.f32 %v158, %v471
    %v473 = vmul.f32 %v159, %v471
    %v474 = vmul.f32 %v472, %v276
    %v475 = vmul.f32 %v473, %v277
    %v476 = vlaneseq
    %v477 = vshrl.u32 %v476, 7
    %v478 = vsub.s32 0, %v477
    %v479 = vrot.slane %v467, %v478
    %v480 = vmul.f32 %v172, %v479
    %v481 = vmul.f32 %v173, %v479
    %v482 = vmul.f32 %v480, %v284
    %v483 = vmul.f32 %v481, %v285
    %v484 = vadd.f32 %v474, %v482
    %v485 = vadd.f32 %v475, %v483
    %v486 = vld [vmem:[#allocation8 + $0x14] sm:$0x1]
    %v487 = vld [vmem:[#allocation8 + $0x15] sm:$0x1]
    %v488 = vlaneseq
    %v489 = vshrl.u32 %v488, 7
    %v490 = vsub.s32 0, %v489
    %v491 = vrot.slane %v486, %v490
    %v492 = vmul.f32 %v95, %v491
    %v493 = vmul.f32 %v96, %v491
    %v494 = vmul.f32 %v492, %v304
    %v495 = vmul.f32 %v493, %v305
    %v496 = vlaneseq
    %v497 = vshrl.u32 %v496, 7
    %v498 = vsub.s32 0, %v497
    %v499 = vrot.slane %v487, %v498
    %v500 = vmul.f32 %v116, %v499
    %v501 = vmul.f32 %v117, %v499
    %v502 = vmul.f32 %v500, %v324
    %v503 = vmul.f32 %v501, %v325
    %v504 = vadd.f32 %v494, %v502
    %v505 = vadd.f32 %v495, %v503
    %v506 = vld [vmem:[#allocation8 + $0x16] sm:$0x1]
    %v507 = vld [vmem:[#allocation8 + $0x17] sm:$0x1]
    %v508 = vlaneseq
    %v509 = vshrl.u32 %v508, 7
    %v510 = vsub.s32 0, %v509
    %v511 = vrot.slane %v506, %v510
    %v512 = vmul.f32 %v102, %v511
    %v513 = vmul.f32 %v103, %v511
    %v514 = vmul.f32 %v512, %v324
    %v515 = vmul.f32 %v513, %v325
    %v516 = vlaneseq
    %v517 = vshrl.u32 %v516, 7
    %v518 = vsub.s32 0, %v517
    %v519 = vrot.slane %v507, %v518
    %v520 = vmul.f32 %v123, %v519
    %v521 = vmul.f32 %v124, %v519
    %v522 = vmul.f32 %v520, %v344
    %v523 = vmul.f32 %v521, %v345
    %v524 = vadd.f32 %v514, %v522
    %v525 = vadd.f32 %v515, %v523
    %v526 = vld [vmem:[#allocation8 + $0x18] sm:$0x1]
    %v527 = vld [vmem:[#allocation8 + $0x19] sm:$0x1]
    %v528 = vlaneseq
    %v529 = vshrl.u32 %v528, 7
    %v530 = vsub.s32 0, %v529
    %v531 = vrot.slane %v526, %v530
    %v532 = vmul.f32 %v109, %v531
    %v533 = vmul.f32 %v110, %v531
    %v534 = vmul.f32 %v532, %v344
    %v535 = vmul.f32 %v533, %v345
    %v536 = vlaneseq
    %v537 = vshrl.u32 %v536, 7
    %v538 = vsub.s32 0, %v537
    %v539 = vrot.slane %v527, %v538
    %v540 = vmul.f32 %v130, %v539
    %v541 = vmul.f32 %v131, %v539
    %v542 = vmul.f32 %v540, %v364
    %v543 = vmul.f32 %v541, %v365
    %v544 = vadd.f32 %v534, %v542
    %v545 = vadd.f32 %v535, %v543
    %v546 = vld [vmem:[#allocation8 + $0x1a] sm:$0x1]
    %v547 = vld [vmem:[#allocation8 + $0x1b] sm:$0x1]
    %v548 = vlaneseq
    %v549 = vshrl.u32 %v548, 7
    %v550 = vsub.s32 0, %v549
    %v551 = vrot.slane %v546, %v550
    %v552 = vmul.f32 %v116, %v551
    %v553 = vmul.f32 %v117, %v551
    %v554 = vmul.f32 %v552, %v364
    %v555 = vmul.f32 %v553, %v365
    %v556 = vlaneseq
    %v557 = vshrl.u32 %v556, 7
    %v558 = vsub.s32 0, %v557
    %v559 = vrot.slane %v547, %v558
    %v560 = vmul.f32 %v137, %v559
    %v561 = vmul.f32 %v138, %v559
    %v562 = vmul.f32 %v560, %v384
    %v563 = vmul.f32 %v561, %v385
    %v564 = vadd.f32 %v554, %v562
    %v565 = vadd.f32 %v555, %v563
    %v566 = vld [vmem:[#allocation8 + $0x1c] sm:$0x1]
    %v567 = vld [vmem:[#allocation8 + $0x1d] sm:$0x1]
    %v568 = vlaneseq
    %v569 = vshrl.u32 %v568, 7
    %v570 = vsub.s32 0, %v569
    %v571 = vrot.slane %v566, %v570
    %v572 = vmul.f32 %v123, %v571
    %v573 = vmul.f32 %v124, %v571
    %v574 = vmul.f32 %v572, %v384
    %v575 = vmul.f32 %v573, %v385
    %v576 = vlaneseq
    %v577 = vshrl.u32 %v576, 7
    %v578 = vsub.s32 0, %v577
    %v579 = vrot.slane %v567, %v578
    %v580 = vmul.f32 %v144, %v579
    %v581 = vmul.f32 %v145, %v579
    %v582 = vmul.f32 %v580, %v404
    %v583 = vmul.f32 %v581, %v405
    %v584 = vadd.f32 %v574, %v582
    %v585 = vadd.f32 %v575, %v583
    %v586 = vld [vmem:[#allocation8 + $0x1e] sm:$0x1]
    %v587 = vld [vmem:[#allocation8 + $0x1f] sm:$0x1]
    %v588 = vlaneseq
    %v589 = vshrl.u32 %v588, 7
    %v590 = vsub.s32 0, %v589
    %v591 = vrot.slane %v586, %v590
    %v592 = vmul.f32 %v130, %v591
    %v593 = vmul.f32 %v131, %v591
    %v594 = vmul.f32 %v592, %v404
    %v595 = vmul.f32 %v593, %v405
    %v596 = vlaneseq
    %v597 = vshrl.u32 %v596, 7
    %v598 = vsub.s32 0, %v597
    %v599 = vrot.slane %v587, %v598
    %v600 = vmul.f32 %v151, %v599
    %v601 = vmul.f32 %v152, %v599
    %v602 = vmul.f32 %v600, %v424
    %v603 = vmul.f32 %v601, %v425
    %v604 = vadd.f32 %v594, %v602
    %v605 = vadd.f32 %v595, %v603
    %v606 = vld [vmem:[#allocation8 + $0x20] sm:$0x1]
    %v607 = vld [vmem:[#allocation8 + $0x21] sm:$0x1]
    %v608 = vlaneseq
    %v609 = vshrl.u32 %v608, 7
    %v610 = vsub.s32 0, %v609
    %v611 = vrot.slane %v606, %v610
    %v612 = vmul.f32 %v137, %v611
    %v613 = vmul.f32 %v138, %v611
    %v614 = vmul.f32 %v612, %v424
    %v615 = vmul.f32 %v613, %v425
    %v616 = vlaneseq
    %v617 = vshrl.u32 %v616, 7
    %v618 = vsub.s32 0, %v617
    %v619 = vrot.slane %v607, %v618
    %v620 = vmul.f32 %v158, %v619
    %v621 = vmul.f32 %v159, %v619
    %v622 = vmul.f32 %v620, %v444
    %v623 = vmul.f32 %v621, %v445
    %v624 = vadd.f32 %v614, %v622
    %v625 = vadd.f32 %v615, %v623
    %v626 = vld [vmem:[#allocation8 + $0x22] sm:$0x1]
    %v627 = vld [vmem:[#allocation8 + $0x23] sm:$0x1]
    %v628 = vlaneseq
    %v629 = vshrl.u32 %v628, 7
    %v630 = vsub.s32 0, %v629
    %v631 = vrot.slane %v626, %v630
    %v632 = vmul.f32 %v144, %v631
    %v633 = vmul.f32 %v145, %v631
    %v634 = vmul.f32 %v632, %v444
    %v635 = vmul.f32 %v633, %v445
    %v636 = vlaneseq
    %v637 = vshrl.u32 %v636, 7
    %v638 = vsub.s32 0, %v637
    %v639 = vrot.slane %v627, %v638
    %v640 = vmul.f32 %v165, %v639
    %v641 = vmul.f32 %v166, %v639
    %v642 = vmul.f32 %v640, %v464
    %v643 = vmul.f32 %v641, %v465
    %v644 = vadd.f32 %v634, %v642
    %v645 = vadd.f32 %v635, %v643
    %v646 = vld [vmem:[#allocation8 + $0x24] sm:$0x1]
    %v647 = vld [vmem:[#allocation8 + $0x25] sm:$0x1]
    %v648 = vlaneseq
    %v649 = vshrl.u32 %v648, 7
    %v650 = vsub.s32 0, %v649
    %v651 = vrot.slane %v646, %v650
    %v652 = vmul.f32 %v151, %v651
    %v653 = vmul.f32 %v152, %v651
    %v654 = vmul.f32 %v652, %v464
    %v655 = vmul.f32 %v653, %v465
    %v656 = vlaneseq
    %v657 = vshrl.u32 %v656, 7
    %v658 = vsub.s32 0, %v657
    %v659 = vrot.slane %v647, %v658
    %v660 = vmul.f32 %v172, %v659
    %v661 = vmul.f32 %v173, %v659
    %v662 = vmul.f32 %v660, %v484
    %v663 = vmul.f32 %v661, %v485
    %v664 = vadd.f32 %v654, %v662
    %v665 = vadd.f32 %v655, %v663
    %v666 = vld [vmem:[#allocation8 + $0x26] sm:$0x1]
    %v667 = vld [vmem:[#allocation8 + $0x27] sm:$0x1]
    %v668 = vlaneseq
    %v669 = vshrl.u32 %v668, 7
    %v670 = vsub.s32 0, %v669
    %v671 = vrot.slane %v666, %v670
    %v672 = vmul.f32 %v95, %v671
    %v673 = vmul.f32 %v96, %v671
    %v674 = vmul.f32 %v672, %v504
    %v675 = vmul.f32 %v673, %v505
    %v676 = vlaneseq
    %v677 = vshrl.u32 %v676, 7
    %v678 = vsub.s32 0, %v677
    %v679 = vrot.slane %v667, %v678
    %v680 = vmul.f32 %v123, %v679
    %v681 = vmul.f32 %v124, %v679
    %v682 = vmul.f32 %v680, %v524
    %v683 = vmul.f32 %v681, %v525
    %v684 = vadd.f32 %v674, %v682
    %v685 = vadd.f32 %v675, %v683
    %v686 = vld [vmem:[#allocation8 + $0x28] sm:$0x1]
    %v687 = vld [vmem:[#allocation8 + $0x29] sm:$0x1]
    %v688 = vlaneseq
    %v689 = vshrl.u32 %v688, 7
    %v690 = vsub.s32 0, %v689
    %v691 = vrot.slane %v686, %v690
    %v692 = vmul.f32 %v102, %v691
    %v693 = vmul.f32 %v103, %v691
    %v694 = vmul.f32 %v692, %v524
    %v695 = vmul.f32 %v693, %v525
    %v696 = vlaneseq
    %v697 = vshrl.u32 %v696, 7
    %v698 = vsub.s32 0, %v697
    %v699 = vrot.slane %v687, %v698
    %v700 = vmul.f32 %v130, %v699
    %v701 = vmul.f32 %v131, %v699
    %v702 = vmul.f32 %v700, %v544
    %v703 = vmul.f32 %v701, %v545
    %v704 = vadd.f32 %v694, %v702
    %v705 = vadd.f32 %v695, %v703
    %v706 = vld [vmem:[#allocation8 + $0x2a] sm:$0x1]
    %v707 = vld [vmem:[#allocation8 + $0x2b] sm:$0x1]
    %v708 = vlaneseq
    %v709 = vshrl.u32 %v708, 7
    %v710 = vsub.s32 0, %v709
    %v711 = vrot.slane %v706, %v710
    %v712 = vmul.f32 %v109, %v711
    %v713 = vmul.f32 %v110, %v711
    %v714 = vmul.f32 %v712, %v544
    %v715 = vmul.f32 %v713, %v545
    %v716 = vlaneseq
    %v717 = vshrl.u32 %v716, 7
    %v718 = vsub.s32 0, %v717
    %v719 = vrot.slane %v707, %v718
    %v720 = vmul.f32 %v137, %v719
    %v721 = vmul.f32 %v138, %v719
    %v722 = vmul.f32 %v720, %v564
    %v723 = vmul.f32 %v721, %v565
    %v724 = vadd.f32 %v714, %v722
    %v725 = vadd.f32 %v715, %v723
    %v726 = vld [vmem:[#allocation8 + $0x2c] sm:$0x1]
    %v727 = vld [vmem:[#allocation8 + $0x2d] sm:$0x1]
    %v728 = vlaneseq
    %v729 = vshrl.u32 %v728, 7
    %v730 = vsub.s32 0, %v729
    %v731 = vrot.slane %v726, %v730
    %v732 = vmul.f32 %v116, %v731
    %v733 = vmul.f32 %v117, %v731
    %v734 = vmul.f32 %v732, %v564
    %v735 = vmul.f32 %v733, %v565
    %v736 = vlaneseq
    %v737 = vshrl.u32 %v736, 7
    %v738 = vsub.s32 0, %v737
    %v739 = vrot.slane %v727, %v738
    %v740 = vmul.f32 %v144, %v739
    %v741 = vmul.f32 %v145, %v739
    %v742 = vmul.f32 %v740, %v584
    %v743 = vmul.f32 %v741, %v585
    %v744 = vadd.f32 %v734, %v742
    %v745 = vadd.f32 %v735, %v743
    %v746 = vld [vmem:[#allocation8 + $0x2e] sm:$0x1]
    %v747 = vld [vmem:[#allocation8 + $0x2f] sm:$0x1]
    %v748 = vlaneseq
    %v749 = vshrl.u32 %v748, 7
    %v750 = vsub.s32 0, %v749
    %v751 = vrot.slane %v746, %v750
    %v752 = vmul.f32 %v123, %v751
    %v753 = vmul.f32 %v124, %v751
    %v754 = vmul.f32 %v752, %v584
    %v755 = vmul.f32 %v753, %v585
    %v756 = vlaneseq
    %v757 = vshrl.u32 %v756, 7
    %v758 = vsub.s32 0, %v757
    %v759 = vrot.slane %v747, %v758
    %v760 = vmul.f32 %v151, %v759
    %v761 = vmul.f32 %v152, %v759
    %v762 = vmul.f32 %v760, %v604
    %v763 = vmul.f32 %v761, %v605
    %v764 = vadd.f32 %v754, %v762
    %v765 = vadd.f32 %v755, %v763
    %v766 = vld [vmem:[#allocation8 + $0x30] sm:$0x1]
    %v767 = vld [vmem:[#allocation8 + $0x31] sm:$0x1]
    %v768 = vlaneseq
    %v769 = vshrl.u32 %v768, 7
    %v770 = vsub.s32 0, %v769
    %v771 = vrot.slane %v766, %v770
    %v772 = vmul.f32 %v130, %v771
    %v773 = vmul.f32 %v131, %v771
    %v774 = vmul.f32 %v772, %v604
    %v775 = vmul.f32 %v773, %v605
    %v776 = vlaneseq
    %v777 = vshrl.u32 %v776, 7
    %v778 = vsub.s32 0, %v777
    %v779 = vrot.slane %v767, %v778
    %v780 = vmul.f32 %v158, %v779
    %v781 = vmul.f32 %v159, %v779
    %v782 = vmul.f32 %v780, %v624
    %v783 = vmul.f32 %v781, %v625
    %v784 = vadd.f32 %v774, %v782
    %v785 = vadd.f32 %v775, %v783
    %v786 = vld [vmem:[#allocation8 + $0x32] sm:$0x1]
    %v787 = vld [vmem:[#allocation8 + $0x33] sm:$0x1]
    %v788 = vlaneseq
    %v789 = vshrl.u32 %v788, 7
    %v790 = vsub.s32 0, %v789
    %v791 = vrot.slane %v786, %v790
    %v792 = vmul.f32 %v137, %v791
    %v793 = vmul.f32 %v138, %v791
    %v794 = vmul.f32 %v792, %v624
    %v795 = vmul.f32 %v793, %v625
    %v796 = vlaneseq
    %v797 = vshrl.u32 %v796, 7
    %v798 = vsub.s32 0, %v797
    %v799 = vrot.slane %v787, %v798
    %v800 = vmul.f32 %v165, %v799
    %v801 = vmul.f32 %v166, %v799
    %v802 = vmul.f32 %v800, %v644
    %v803 = vmul.f32 %v801, %v645
    %v804 = vadd.f32 %v794, %v802
    %v805 = vadd.f32 %v795, %v803
    %v806 = vld [vmem:[#allocation8 + $0x34] sm:$0x1]
    %v807 = vld [vmem:[#allocation8 + $0x35] sm:$0x1]
    %v808 = vlaneseq
    %v809 = vshrl.u32 %v808, 7
    %v810 = vsub.s32 0, %v809
    %v811 = vrot.slane %v806, %v810
    %v812 = vmul.f32 %v144, %v811
    %v813 = vmul.f32 %v145, %v811
    %v814 = vmul.f32 %v812, %v644
    %v815 = vmul.f32 %v813, %v645
    %v816 = vlaneseq
    %v817 = vshrl.u32 %v816, 7
    %v818 = vsub.s32 0, %v817
    %v819 = vrot.slane %v807, %v818
    %v820 = vmul.f32 %v172, %v819
    %v821 = vmul.f32 %v173, %v819
    %v822 = vmul.f32 %v820, %v664
    %v823 = vmul.f32 %v821, %v665
    %v824 = vadd.f32 %v814, %v822
    %v825 = vadd.f32 %v815, %v823
    %v826 = vpack.c.bf16 %v685, %v684
    %827 = vst [vmem:[#allocation2 + $0x8] sm:$0xff] %v826
    %v828 = vpack.c.bf16 %v705, %v704
    %829 = vst [vmem:[#allocation2 + $0x10] sm:$0xff] %v828
    %v830 = vpack.c.bf16 %v725, %v724
    %831 = vst [vmem:[#allocation2 + $0x18] sm:$0xff] %v830
    %v832 = vpack.c.bf16 %v745, %v744
    %833 = vst [vmem:[#allocation2 + $0x20] sm:$0xff] %v832
    %v834 = vpack.c.bf16 %v765, %v764
    %835 = vst [vmem:[#allocation2 + $0x28] sm:$0xff] %v834
    %v836 = vpack.c.bf16 %v785, %v784
    %837 = vst [vmem:[#allocation2 + $0x30] sm:$0xff] %v836
    %v838 = vpack.c.bf16 %v805, %v804
    %839 = vst [vmem:[#allocation2 + $0x38] sm:$0xff] %v838
    %v840 = vpack.c.bf16 %v825, %v824
    %841 = vst [vmem:[#allocation2 + $0x40] sm:$0xff] %v840
    %v842 = vld [vmem:[#allocation2] sm:$0xff]
    %v843 = vld [vmem:[#allocation2 + $0x8] sm:$0xff]
    %v844 = vld [vmem:[#allocation2 + $0x10] sm:$0xff]
    %v845 = vld [vmem:[#allocation2 + $0x18] sm:$0xff]
    %v846 = vld [vmem:[#allocation2 + $0x20] sm:$0xff]
    %v847 = vld [vmem:[#allocation2 + $0x28] sm:$0xff]
    %v848 = vld [vmem:[#allocation2 + $0x30] sm:$0xff]
    %v849 = vld [vmem:[#allocation2 + $0x38] sm:$0xff]
    %v850 = vld [vmem:[#allocation2 + $0x40] sm:$0xff]
    %v851 = vld [vmem:[#allocation9] sm:$0xf]
    %v852 = vld [vmem:[#allocation9 + $0x4] sm:$0xf]
    %v853 = vld [vmem:[#allocation9 + $0x8] sm:$0xf]
    %v854 = vld [vmem:[#allocation9 + $0xc] sm:$0xf]
    %v855 = vld [vmem:[#allocation9 + $0x10] sm:$0xf]
    %v856 = vld [vmem:[#allocation9 + $0x14] sm:$0xf]
    %v857 = vld [vmem:[#allocation9 + $0x18] sm:$0xf]
    %v858 = vld [vmem:[#allocation9 + $0x1c] sm:$0xf]
    %v859 = vld [vmem:[#allocation9 + $0x20] sm:$0xf]
    %v860 = vld [vmem:[#allocation9 + $0x24] sm:$0xf]
    %v861 = vld [vmem:[#allocation9 + $0x28] sm:$0xf]
    %v862 = vld [vmem:[#allocation9 + $0x2c] sm:$0xf]
    %v863 = vld [vmem:[#allocation9 + $0x30] sm:$0xf]
    %v864 = vld [vmem:[#allocation9 + $0x34] sm:$0xf]
    %v865 = vld [vmem:[#allocation9 + $0x38] sm:$0xf]
    %v866 = vld [vmem:[#allocation9 + $0x3c] sm:$0xf]
    %v867 = vld [vmem:[#allocation9 + $0x40] sm:$0xf]
    %v868 = vld [vmem:[#allocation9 + $0x44] sm:$0xf]
    %v869 = vld [vmem:[#allocation9 + $0x48] sm:$0xf]
    %v870 = vld [vmem:[#allocation9 + $0x4c] sm:$0xf]
    %v871 = vld [vmem:[#allocation9 + $0x50] sm:$0xf]
    %v872 = vld [vmem:[#allocation9 + $0x54] sm:$0xf]
    %v873 = vld [vmem:[#allocation9 + $0x58] sm:$0xf]
    %v874 = vld [vmem:[#allocation9 + $0x5c] sm:$0xf]
    %v875 = vld [vmem:[#allocation9 + $0x60] sm:$0xf]
    %v876 = vld [vmem:[#allocation9 + $0x64] sm:$0xf]
    %v877 = vld [vmem:[#allocation9 + $0x68] sm:$0xf]
    %v878 = vld [vmem:[#allocation9 + $0x6c] sm:$0xf]
    %v879 = vld [vmem:[#allocation9 + $0x70] sm:$0xf]
    %v880 = vld [vmem:[#allocation9 + $0x74] sm:$0xf]
    %v881 = vld [vmem:[#allocation9 + $0x78] sm:$0xf]
    %v882 = vld [vmem:[#allocation9 + $0x7c] sm:$0xf]
    %v883 = vld [vmem:[#allocation9 + $0x80] sm:$0xf]
    %v884 = vld [vmem:[#allocation9 + $0x84] sm:$0xf]
    %v885 = vld [vmem:[#allocation9 + $0x88] sm:$0xf]
    %v886 = vld [vmem:[#allocation9 + $0x8c] sm:$0xf]
    %v887 = vld [vmem:[#allocation9 + $0x90] sm:$0xf]
    %v888 = vld [vmem:[#allocation9 + $0x94] sm:$0xf]
    %v889 = vld [vmem:[#allocation9 + $0x98] sm:$0xf]
    %v890 = vld [vmem:[#allocation9 + $0x9c] sm:$0xf]
    %v891 = vld [vmem:[#allocation9 + $0xa0] sm:$0xf]
    %v892 = vld [vmem:[#allocation9 + $0xa4] sm:$0xf]
    %v893 = vld [vmem:[#allocation9 + $0xa8] sm:$0xf]
    %v894 = vld [vmem:[#allocation9 + $0xac] sm:$0xf]
    %v895 = vld [vmem:[#allocation9 + $0xb0] sm:$0xf]
    %v896 = vld [vmem:[#allocation9 + $0xb4] sm:$0xf]
    %v897 = vld [vmem:[#allocation9 + $0xb8] sm:$0xf]
    %v898 = vld [vmem:[#allocation9 + $0xbc] sm:$0xf]
    %v899 = vld [vmem:[#allocation9 + $0xc0] sm:$0xf]
    %v900 = vld [vmem:[#allocation9 + $0xc4] sm:$0xf]
    %v901 = vld [vmem:[#allocation9 + $0xc8] sm:$0xf]
    %v902 = vld [vmem:[#allocation9 + $0xcc] sm:$0xf]
    %v903 = vld [vmem:[#allocation9 + $0xd0] sm:$0xf]
    %v904 = vld [vmem:[#allocation9 + $0xd4] sm:$0xf]
    %v905 = vld [vmem:[#allocation9 + $0xd8] sm:$0xf]
    %v906 = vld [vmem:[#allocation9 + $0xdc] sm:$0xf]
    %v907 = vld [vmem:[#allocation9 + $0xe0] sm:$0xf]
    %v908 = vld [vmem:[#allocation9 + $0xe4] sm:$0xf]
    %v909 = vld [vmem:[#allocation9 + $0xe8] sm:$0xf]
    %v910 = vld [vmem:[#allocation9 + $0xec] sm:$0xf]
    %v911 = vld [vmem:[#allocation9 + $0xf0] sm:$0xf]
    %v912 = vld [vmem:[#allocation9 + $0xf4] sm:$0xf]
    %v913 = vld [vmem:[#allocation9 + $0xf8] sm:$0xf]
    %v914 = vld [vmem:[#allocation9 + $0xfc] sm:$0xf]
    %v915 = vld [vmem:[#allocation9 + $0x100] sm:$0xf]
    %v916 = vld [vmem:[#allocation9 + $0x104] sm:$0xf]
    %v917 = vld [vmem:[#allocation9 + $0x108] sm:$0xf]
    %v918 = vld [vmem:[#allocation9 + $0x10c] sm:$0xf]
    %v919 = vld [vmem:[#allocation9 + $0x110] sm:$0xf]
    %v920 = vld [vmem:[#allocation9 + $0x114] sm:$0xf]
    %v921 = vld [vmem:[#allocation9 + $0x118] sm:$0xf]
    %v922 = vld [vmem:[#allocation9 + $0x11c] sm:$0xf]
    %v923 = vld [vmem:[#allocation9 + $0x120] sm:$0xf]
    %v924 = vld [vmem:[#allocation9 + $0x124] sm:$0xf]
    %v925 = vld [vmem:[#allocation9 + $0x128] sm:$0xf]
    %v926 = vld [vmem:[#allocation9 + $0x12c] sm:$0xf]
    %v927 = vld [vmem:[#allocation9 + $0x130] sm:$0xf]
    %v928 = vld [vmem:[#allocation9 + $0x134] sm:$0xf]
    %v929 = vld [vmem:[#allocation9 + $0x138] sm:$0xf]
    %v930 = vld [vmem:[#allocation9 + $0x13c] sm:$0xf]
    %v931 = vld [vmem:[#allocation9 + $0x140] sm:$0xf]
    %v932 = vld [vmem:[#allocation9 + $0x144] sm:$0xf]
    %v933 = vld [vmem:[#allocation9 + $0x148] sm:$0xf]
    %v934 = vld [vmem:[#allocation9 + $0x14c] sm:$0xf]
    %v935 = vld [vmem:[#allocation9 + $0x150] sm:$0xf]
    %v936 = vld [vmem:[#allocation9 + $0x154] sm:$0xf]
    %v937 = vld [vmem:[#allocation9 + $0x158] sm:$0xf]
    %v938 = vld [vmem:[#allocation9 + $0x15c] sm:$0xf]
    %v939 = vld [vmem:[#allocation9 + $0x160] sm:$0xf]
    %v940 = vld [vmem:[#allocation9 + $0x164] sm:$0xf]
    %v941 = vld [vmem:[#allocation9 + $0x168] sm:$0xf]
    %v942 = vld [vmem:[#allocation9 + $0x16c] sm:$0xf]
    %v943 = vld [vmem:[#allocation9 + $0x170] sm:$0xf]
    %v944 = vld [vmem:[#allocation9 + $0x174] sm:$0xf]
    %v945 = vld [vmem:[#allocation9 + $0x178] sm:$0xf]
    %v946 = vld [vmem:[#allocation9 + $0x17c] sm:$0xf]
    %v947 = vld [vmem:[#allocation9 + $0x180] sm:$0xf]
    %v948 = vld [vmem:[#allocation9 + $0x184] sm:$0xf]
    %v949 = vld [vmem:[#allocation9 + $0x188] sm:$0xf]
    %v950 = vld [vmem:[#allocation9 + $0x18c] sm:$0xf]
    %v951 = vld [vmem:[#allocation9 + $0x190] sm:$0xf]
    %v952 = vld [vmem:[#allocation9 + $0x194] sm:$0xf]
    %v953 = vld [vmem:[#allocation9 + $0x198] sm:$0xf]
    %v954 = vld [vmem:[#allocation9 + $0x19c] sm:$0xf]
    %v955 = vld [vmem:[#allocation9 + $0x1a0] sm:$0xf]
    %v956 = vld [vmem:[#allocation9 + $0x1a4] sm:$0xf]
    %v957 = vld [vmem:[#allocation9 + $0x1a8] sm:$0xf]
    %v958 = vld [vmem:[#allocation9 + $0x1ac] sm:$0xf]
    %v959 = vld [vmem:[#allocation9 + $0x1b0] sm:$0xf]
    %v960 = vld [vmem:[#allocation9 + $0x1b4] sm:$0xf]
    %v961 = vld [vmem:[#allocation9 + $0x1b8] sm:$0xf]
    %v962 = vld [vmem:[#allocation9 + $0x1bc] sm:$0xf]
    %v963 = vld [vmem:[#allocation9 + $0x1c0] sm:$0xf]
    %v964 = vld [vmem:[#allocation9 + $0x1c4] sm:$0xf]
    %v965 = vld [vmem:[#allocation9 + $0x1c8] sm:$0xf]
    %v966 = vld [vmem:[#allocation9 + $0x1cc] sm:$0xf]
    %v967 = vld [vmem:[#allocation9 + $0x1d0] sm:$0xf]
    %v968 = vld [vmem:[#allocation9 + $0x1d4] sm:$0xf]
    %v969 = vld [vmem:[#allocation9 + $0x1d8] sm:$0xf]
    %v970 = vld [vmem:[#allocation9 + $0x1dc] sm:$0xf]
    %v971 = vld [vmem:[#allocation9 + $0x1e0] sm:$0xf]
    %v972 = vld [vmem:[#allocation9 + $0x1e4] sm:$0xf]
    %v973 = vld [vmem:[#allocation9 + $0x1e8] sm:$0xf]
    %v974 = vld [vmem:[#allocation9 + $0x1ec] sm:$0xf]
    %v975 = vld [vmem:[#allocation9 + $0x1f0] sm:$0xf]
    %v976 = vld [vmem:[#allocation9 + $0x1f4] sm:$0xf]
    %v977 = vld [vmem:[#allocation9 + $0x1f8] sm:$0xf]
    %v978 = vld [vmem:[#allocation9 + $0x1fc] sm:$0xf]
    %v979 = vld [vmem:[#allocation9 + $0x200] sm:$0xf]
    %v980 = vld [vmem:[#allocation9 + $0x204] sm:$0xf]
    %v981 = vld [vmem:[#allocation9 + $0x208] sm:$0xf]
    %v982 = vld [vmem:[#allocation9 + $0x20c] sm:$0xf]
    %v983 = vld [vmem:[#allocation9 + $0x210] sm:$0xf]
    %v984 = vld [vmem:[#allocation9 + $0x214] sm:$0xf]
    %v985 = vld [vmem:[#allocation9 + $0x218] sm:$0xf]
    %v986 = vld [vmem:[#allocation9 + $0x21c] sm:$0xf]
    %v987 = vld [vmem:[#allocation9 + $0x220] sm:$0xf]
    %v988 = vld [vmem:[#allocation9 + $0x224] sm:$0xf]
    %v989 = vld [vmem:[#allocation9 + $0x228] sm:$0xf]
    %v990 = vld [vmem:[#allocation9 + $0x22c] sm:$0xf]
    %v991 = vld [vmem:[#allocation9 + $0x230] sm:$0xf]
    %v992 = vld [vmem:[#allocation9 + $0x234] sm:$0xf]
    %v993 = vld [vmem:[#allocation9 + $0x238] sm:$0xf]
    %v994 = vld [vmem:[#allocation9 + $0x23c] sm:$0xf]
    %v1139 = vunpack.c.l.b16 %v851
    %v1140 = vunpack.c.l.b16 %v852
    %v1141 = vunpack.c.l.b16 %v853
    %v1142 = vunpack.c.l.b16 %v854
    %v1143 = vunpack.c.l.b16 %v855
    %v1144 = vunpack.c.l.b16 %v856
    %v1145 = vunpack.c.l.b16 %v857
    %v1146 = vunpack.c.l.b16 %v858
    %v1147 = vunpack.c.l.b16 %v859
    %v1148 = vunpack.c.l.b16 %v860
    %v1149 = vunpack.c.l.b16 %v861
    %v1150 = vunpack.c.l.b16 %v862
    %v1151 = vunpack.c.l.b16 %v863
    %v1152 = vunpack.c.l.b16 %v864
    %v1153 = vunpack.c.l.b16 %v865
    %v1154 = vunpack.c.l.b16 %v866
    %v1155 = vunpack.c.l.b16 %v867
    %v1156 = vunpack.c.l.b16 %v868
    %v1157 = vunpack.c.l.b16 %v869
    %v1158 = vunpack.c.l.b16 %v870
    %v1159 = vunpack.c.l.b16 %v871
    %v1160 = vunpack.c.l.b16 %v872
    %v1161 = vunpack.c.l.b16 %v873
    %v1162 = vunpack.c.l.b16 %v874
    %v1163 = vunpack.c.l.b16 %v875
    %v1164 = vunpack.c.l.b16 %v876
    %v1165 = vunpack.c.l.b16 %v877
    %v1166 = vunpack.c.l.b16 %v878
    %v1167 = vunpack.c.l.b16 %v879
    %v1168 = vunpack.c.l.b16 %v880
    %v1169 = vunpack.c.l.b16 %v881
    %v1170 = vunpack.c.l.b16 %v882
    %v1171 = vunpack.c.l.b16 %v883
    %v1172 = vunpack.c.l.b16 %v884
    %v1173 = vunpack.c.l.b16 %v885
    %v1174 = vunpack.c.l.b16 %v886
    %v1175 = vunpack.c.l.b16 %v887
    %v1176 = vunpack.c.l.b16 %v888
    %v1177 = vunpack.c.l.b16 %v889
    %v1178 = vunpack.c.l.b16 %v890
    %v1179 = vunpack.c.l.b16 %v891
    %v1180 = vunpack.c.l.b16 %v892
    %v1181 = vunpack.c.l.b16 %v893
    %v1182 = vunpack.c.l.b16 %v894
    %v1183 = vunpack.c.l.b16 %v895
    %v1184 = vunpack.c.l.b16 %v896
    %v1185 = vunpack.c.l.b16 %v897
    %v1186 = vunpack.c.l.b16 %v898
    %v1187 = vunpack.c.l.b16 %v899
    %v1188 = vunpack.c.l.b16 %v900
    %v1189 = vunpack.c.l.b16 %v901
    %v1190 = vunpack.c.l.b16 %v902
    %v1191 = vunpack.c.l.b16 %v903
    %v1192 = vunpack.c.l.b16 %v904
    %v1193 = vunpack.c.l.b16 %v905
    %v1194 = vunpack.c.l.b16 %v906
    %v1195 = vunpack.c.l.b16 %v907
    %v1196 = vunpack.c.l.b16 %v908
    %v1197 = vunpack.c.l.b16 %v909
    %v1198 = vunpack.c.l.b16 %v910
    %v1199 = vunpack.c.l.b16 %v911
    %v1200 = vunpack.c.l.b16 %v912
    %v1201 = vunpack.c.l.b16 %v913
    %v1202 = vunpack.c.l.b16 %v914
    %v1203 = vunpack.c.l.b16 %v915
    %v1204 = vunpack.c.l.b16 %v916
    %v1205 = vunpack.c.l.b16 %v917
    %v1206 = vunpack.c.l.b16 %v918
    %v1207 = vunpack.c.l.b16 %v919
    %v1208 = vunpack.c.l.b16 %v920
    %v1209 = vunpack.c.l.b16 %v921
    %v1210 = vunpack.c.l.b16 %v922
    %v1211 = vunpack.c.l.b16 %v923
    %v1212 = vunpack.c.l.b16 %v924
    %v1213 = vunpack.c.l.b16 %v925
    %v1214 = vunpack.c.l.b16 %v926
    %v1215 = vunpack.c.l.b16 %v927
    %v1216 = vunpack.c.l.b16 %v928
    %v1217 = vunpack.c.l.b16 %v929
    %v1218 = vunpack.c.l.b16 %v930
    %v1219 = vunpack.c.l.b16 %v931
    %v1220 = vunpack.c.l.b16 %v932
    %v1221 = vunpack.c.l.b16 %v933
    %v1222 = vunpack.c.l.b16 %v934
    %v1223 = vunpack.c.l.b16 %v935
    %v1224 = vunpack.c.l.b16 %v936
    %v1225 = vunpack.c.l.b16 %v937
    %v1226 = vunpack.c.l.b16 %v938
    %v1227 = vunpack.c.l.b16 %v939
    %v1228 = vunpack.c.l.b16 %v940
    %v1229 = vunpack.c.l.b16 %v941
    %v1230 = vunpack.c.l.b16 %v942
    %v1231 = vunpack.c.l.b16 %v943
    %v1232 = vunpack.c.l.b16 %v944
    %v1233 = vunpack.c.l.b16 %v945
    %v1234 = vunpack.c.l.b16 %v946
    %v1235 = vunpack.c.l.b16 %v947
    %v1236 = vunpack.c.l.b16 %v948
    %v1237 = vunpack.c.l.b16 %v949
    %v1238 = vunpack.c.l.b16 %v950
    %v1239 = vunpack.c.l.b16 %v951
    %v1240 = vunpack.c.l.b16 %v952
    %v1241 = vunpack.c.l.b16 %v953
    %v1242 = vunpack.c.l.b16 %v954
    %v1243 = vunpack.c.l.b16 %v955
    %v1244 = vunpack.c.l.b16 %v956
    %v1245 = vunpack.c.l.b16 %v957
    %v1246 = vunpack.c.l.b16 %v958
    %v1247 = vunpack.c.l.b16 %v959
    %v1248 = vunpack.c.l.b16 %v960
    %v1249 = vunpack.c.l.b16 %v961
    %v1250 = vunpack.c.l.b16 %v962
    %v1251 = vunpack.c.l.b16 %v963
    %v1252 = vunpack.c.l.b16 %v964
    %v1253 = vunpack.c.l.b16 %v965
    %v1254 = vunpack.c.l.b16 %v966
    %v1255 = vunpack.c.l.b16 %v967
    %v1256 = vunpack.c.l.b16 %v968
    %v1257 = vunpack.c.l.b16 %v969
    %v1258 = vunpack.c.l.b16 %v970
    %v1259 = vunpack.c.l.b16 %v971
    %v1260 = vunpack.c.l.b16 %v972
    %v1261 = vunpack.c.l.b16 %v973
    %v1262 = vunpack.c.l.b16 %v974
    %v1263 = vunpack.c.l.b16 %v975
    %v1264 = vunpack.c.l.b16 %v976
    %v1265 = vunpack.c.l.b16 %v977
    %v1266 = vunpack.c.l.b16 %v978
    %v1267 = vunpack.c.l.b16 %v979
    %v1268 = vunpack.c.l.b16 %v980
    %v1269 = vunpack.c.l.b16 %v981
    %v1270 = vunpack.c.l.b16 %v982
    %v1271 = vunpack.c.l.b16 %v983
    %v1272 = vunpack.c.l.b16 %v984
    %v1273 = vunpack.c.l.b16 %v985
    %v1274 = vunpack.c.l.b16 %v986
    %v1275 = vunpack.c.l.b16 %v987
    %v1276 = vunpack.c.l.b16 %v988
    %v1277 = vunpack.c.l.b16 %v989
    %v1278 = vunpack.c.l.b16 %v990
    %v1279 = vunpack.c.l.b16 %v991
    %v1280 = vunpack.c.l.b16 %v992
    %v1281 = vunpack.c.l.b16 %v993
    %v1282 = vunpack.c.l.b16 %v994
    %v1283 = vpack.c.b16 %v1140, %v1139
    %v1284 = vpack.c.b16 %v1142, %v1141
    %v1285 = vpack.c.b16 %v1144, %v1143
    %v1286 = vpack.c.b16 %v1146, %v1145
    %v1287 = vpack.c.b16 %v1148, %v1147
    %v1288 = vpack.c.b16 %v1150, %v1149
    %v1289 = vpack.c.b16 %v1152, %v1151
    %v1290 = vpack.c.b16 %v1154, %v1153
    %v1291 = vpack.c.b16 %v1156, %v1155
    %v1292 = vpack.c.b16 %v1158, %v1157
    %v1293 = vpack.c.b16 %v1160, %v1159
    %v1294 = vpack.c.b16 %v1162, %v1161
    %v1295 = vpack.c.b16 %v1164, %v1163
    %v1296 = vpack.c.b16 %v1166, %v1165
    %v1297 = vpack.c.b16 %v1168, %v1167
    %v1298 = vpack.c.b16 %v1170, %v1169
    %v1299 = vpack.c.b16 %v1172, %v1171
    %v1300 = vpack.c.b16 %v1174, %v1173
    %v1301 = vpack.c.b16 %v1176, %v1175
    %v1302 = vpack.c.b16 %v1178, %v1177
    %v1303 = vpack.c.b16 %v1180, %v1179
    %v1304 = vpack.c.b16 %v1182, %v1181
    %v1305 = vpack.c.b16 %v1184, %v1183
    %v1306 = vpack.c.b16 %v1186, %v1185
    %v1307 = vpack.c.b16 %v1188, %v1187
    %v1308 = vpack.c.b16 %v1190, %v1189
    %v1309 = vpack.c.b16 %v1192, %v1191
    %v1310 = vpack.c.b16 %v1194, %v1193
    %v1311 = vpack.c.b16 %v1196, %v1195
    %v1312 = vpack.c.b16 %v1198, %v1197
    %v1313 = vpack.c.b16 %v1200, %v1199
    %v1314 = vpack.c.b16 %v1202, %v1201
    %v1315 = vpack.c.b16 %v1204, %v1203
    %v1316 = vpack.c.b16 %v1206, %v1205
    %v1317 = vpack.c.b16 %v1208, %v1207
    %v1318 = vpack.c.b16 %v1210, %v1209
    %v1319 = vpack.c.b16 %v1212, %v1211
    %v1320 = vpack.c.b16 %v1214, %v1213
    %v1321 = vpack.c.b16 %v1216, %v1215
    %v1322 = vpack.c.b16 %v1218, %v1217
    %v1323 = vpack.c.b16 %v1220, %v1219
    %v1324 = vpack.c.b16 %v1222, %v1221
    %v1325 = vpack.c.b16 %v1224, %v1223
    %v1326 = vpack.c.b16 %v1226, %v1225
    %v1327 = vpack.c.b16 %v1228, %v1227
    %v1328 = vpack.c.b16 %v1230, %v1229
    %v1329 = vpack.c.b16 %v1232, %v1231
    %v1330 = vpack.c.b16 %v1234, %v1233
    %v1331 = vpack.c.b16 %v1236, %v1235
    %v1332 = vpack.c.b16 %v1238, %v1237
    %v1333 = vpack.c.b16 %v1240, %v1239
    %v1334 = vpack.c.b16 %v1242, %v1241
    %v1335 = vpack.c.b16 %v1244, %v1243
    %v1336 = vpack.c.b16 %v1246, %v1245
    %v1337 = vpack.c.b16 %v1248, %v1247
    %v1338 = vpack.c.b16 %v1250, %v1249
    %v1339 = vpack.c.b16 %v1252, %v1251
    %v1340 = vpack.c.b16 %v1254, %v1253
    %v1341 = vpack.c.b16 %v1256, %v1255
    %v1342 = vpack.c.b16 %v1258, %v1257
    %v1343 = vpack.c.b16 %v1260, %v1259
    %v1344 = vpack.c.b16 %v1262, %v1261
    %v1345 = vpack.c.b16 %v1264, %v1263
    %v1346 = vpack.c.b16 %v1266, %v1265
    %v1347 = vpack.c.b16 %v1268, %v1267
    %v1348 = vpack.c.b16 %v1270, %v1269
    %v1349 = vpack.c.b16 %v1272, %v1271
    %v1350 = vpack.c.b16 %v1274, %v1273
    %v1351 = vpack.c.b16 %v1276, %v1275
    %v1352 = vpack.c.b16 %v1278, %v1277
    %v1353 = vpack.c.b16 %v1280, %v1279
    %v1354 = vpack.c.b16 %v1282, %v1281
    %1427 = vmatprep.subr.bf16.mxu0 0
    %1428 = vmatpush1.bf16.msra.mxu0 %v1283
    %1429 = vmatprep.subr.bf16.mxu0 0
    %1430 = vmatpush1.bf16.msra.mxu0 %v1284
    %1431 = vmatprep.subr.bf16.mxu0 0
    %1432 = vmatpush1.bf16.msra.mxu0 %v1285
    %1433 = vmatprep.subr.bf16.mxu0 0
    %1434 = vmatpush1.bf16.msra.mxu0 %v1286
    %1435 = vmatprep.subr.bf16.mxu0 0
    %1436 = vmatpush1.bf16.msra.mxu0 %v1287
    %1437 = vmatprep.subr.bf16.mxu0 0
    %1438 = vmatpush1.bf16.msra.mxu0 %v1288
    %1439 = vmatprep.subr.bf16.mxu0 0
    %1440 = vmatpush1.bf16.msra.mxu0 %v1289
    %1441 = vmatprep.subr.bf16.mxu0 0
    %1442 = vmatpush1.bf16.msra.mxu0 %v1290
    %1443 = vmatprep.subr.bf16.mxu0 0
    %1444 = vmatpush1.bf16.msra.mxu0 %v1291
    %1445 = vmatprep.subr.bf16.mxu0 0
    %1446 = vmatpush1.bf16.msra.mxu0 %v1292
    %1447 = vmatprep.subr.bf16.mxu0 0
    %1448 = vmatpush1.bf16.msra.mxu0 %v1293
    %1449 = vmatprep.subr.bf16.mxu0 0
    %1450 = vmatpush1.bf16.msra.mxu0 %v1294
    %1451 = vmatprep.subr.bf16.mxu0 0
    %1452 = vmatpush1.bf16.msra.mxu0 %v1295
    %1453 = vmatprep.subr.bf16.mxu0 0
    %1454 = vmatpush1.bf16.msra.mxu0 %v1296
    %1455 = vmatprep.subr.bf16.mxu0 0
    %1456 = vmatpush1.bf16.msra.mxu0 %v1297
    %1457 = vmatprep.subr.bf16.mxu0 0
    %1458 = vmatpush1.bf16.msra.mxu0 %v1298
    %1459 = vmatprep.mubr.bf16.mxu0 %v843
    %1460 = vmatmul.mubr.bf16.gmra.mrb[0].mxu0 %v842
    %v1461 = vpop.f32.mrb[0].mxu0
    %v1462 = vadd.f32 0.0, %v1461
    %v1463 = vpop.f32.mrb[0].mxu0
    %v1464 = vpop.f32.mrb[0].mxu0
    %v1465 = vadd.f32 0.0, %v1464
    %v1466 = vpop.f32.mrb[0].mxu0
    %1467 = vdwg.mxu0
    %1468 = vmatprep.subr.bf16.mxu0 0
    %1469 = vmatpush1.bf16.msra.mxu0 %v1299
    %1470 = vmatprep.subr.bf16.mxu0 0
    %1471 = vmatpush1.bf16.msra.mxu0 %v1300
    %1472 = vmatprep.subr.bf16.mxu0 0
    %1473 = vmatpush1.bf16.msra.mxu0 %v1301
    %1474 = vmatprep.subr.bf16.mxu0 0
    %1475 = vmatpush1.bf16.msra.mxu0 %v1302
    %1476 = vmatprep.subr.bf16.mxu0 0
    %1477 = vmatpush1.bf16.msra.mxu0 %v1303
    %1478 = vmatprep.subr.bf16.mxu0 0
    %1479 = vmatpush1.bf16.msra.mxu0 %v1304
    %1480 = vmatprep.subr.bf16.mxu0 0
    %1481 = vmatpush1.bf16.msra.mxu0 %v1305
    %1482 = vmatprep.subr.bf16.mxu0 0
    %1483 = vmatpush1.bf16.msra.mxu0 %v1306
    %1484 = vmatprep.subr.bf16.mxu0 0
    %1485 = vmatpush1.bf16.msra.mxu0 %v1307
    %1486 = vmatprep.subr.bf16.mxu0 0
    %1487 = vmatpush1.bf16.msra.mxu0 %v1308
    %1488 = vmatprep.subr.bf16.mxu0 0
    %1489 = vmatpush1.bf16.msra.mxu0 %v1309
    %1490 = vmatprep.subr.bf16.mxu0 0
    %1491 = vmatpush1.bf16.msra.mxu0 %v1310
    %1492 = vmatprep.subr.bf16.mxu0 0
    %1493 = vmatpush1.bf16.msra.mxu0 %v1311
    %1494 = vmatprep.subr.bf16.mxu0 0
    %1495 = vmatpush1.bf16.msra.mxu0 %v1312
    %1496 = vmatprep.subr.bf16.mxu0 0
    %1497 = vmatpush1.bf16.msra.mxu0 %v1313
    %1498 = vmatprep.subr.bf16.mxu0 0
    %1499 = vmatpush1.bf16.msra.mxu0 %v1314
    %1500 = vmatprep.mubr.bf16.mxu0 %v845
    %1501 = vmatmul.mubr.bf16.gmra.mrb[0].mxu0 %v844
    %v1502 = vpop.f32.mrb[0].mxu0
    %v1503 = vadd.f32 %v1462, %v1502
    %v1504 = vpop.f32.mrb[0].mxu0
    %v1505 = vpop.f32.mrb[0].mxu0
    %v1506 = vadd.f32 %v1465, %v1505
    %v1507 = vpop.f32.mrb[0].mxu0
    %1508 = vdwg.mxu0
    %1509 = vmatprep.subr.bf16.mxu0 0
    %1510 = vmatpush1.bf16.msra.mxu0 %v1315
    %1511 = vmatprep.subr.bf16.mxu0 0
    %1512 = vmatpush1.bf16.msra.mxu0 %v1316
    %1513 = vmatprep.subr.bf16.mxu0 0
    %1514 = vmatpush1.bf16.msra.mxu0 %v1317
    %1515 = vmatprep.subr.bf16.mxu0 0
    %1516 = vmatpush1.bf16.msra.mxu0 %v1318
    %1517 = vmatprep.subr.bf16.mxu0 0
    %1518 = vmatpush1.bf16.msra.mxu0 %v1319
    %1519 = vmatprep.subr.bf16.mxu0 0
    %1520 = vmatpush1.bf16.msra.mxu0 %v1320
    %1521 = vmatprep.subr.bf16.mxu0 0
    %1522 = vmatpush1.bf16.msra.mxu0 %v1321
    %1523 = vmatprep.subr.bf16.mxu0 0
    %1524 = vmatpush1.bf16.msra.mxu0 %v1322
    %1525 = vmatprep.subr.bf16.mxu0 0
    %1526 = vmatpush1.bf16.msra.mxu0 %v1323
    %1527 = vmatprep.subr.bf16.mxu0 0
    %1528 = vmatpush1.bf16.msra.mxu0 %v1324
    %1529 = vmatprep.subr.bf16.mxu0 0
    %1530 = vmatpush1.bf16.msra.mxu0 %v1325
    %1531 = vmatprep.subr.bf16.mxu0 0
    %1532 = vmatpush1.bf16.msra.mxu0 %v1326
    %1533 = vmatprep.subr.bf16.mxu0 0
    %1534 = vmatpush1.bf16.msra.mxu0 %v1327
    %1535 = vmatprep.subr.bf16.mxu0 0
    %1536 = vmatpush1.bf16.msra.mxu0 %v1328
    %1537 = vmatprep.subr.bf16.mxu0 0
    %1538 = vmatpush1.bf16.msra.mxu0 %v1329
    %1539 = vmatprep.subr.bf16.mxu0 0
    %1540 = vmatpush1.bf16.msra.mxu0 %v1330
    %1541 = vmatprep.mubr.bf16.mxu0 %v847
    %1542 = vmatmul.mubr.bf16.gmra.mrb[0].mxu0 %v846
    %v1543 = vpop.f32.mrb[0].mxu0
    %v1544 = vadd.f32 %v1503, %v1543
    %v1545 = vpop.f32.mrb[0].mxu0
    %v1546 = vpop.f32.mrb[0].mxu0
    %v1547 = vadd.f32 %v1506, %v1546
    %v1548 = vpop.f32.mrb[0].mxu0
    %1549 = vdwg.mxu0
    %1550 = vmatprep.subr.bf16.mxu0 0
    %1551 = vmatpush1.bf16.msra.mxu0 %v1331
    %1552 = vmatprep.subr.bf16.mxu0 0
    %1553 = vmatpush1.bf16.msra.mxu0 %v1332
    %1554 = vmatprep.subr.bf16.mxu0 0
    %1555 = vmatpush1.bf16.msra.mxu0 %v1333
    %1556 = vmatprep.subr.bf16.mxu0 0
    %1557 = vmatpush1.bf16.msra.mxu0 %v1334
    %1558 = vmatprep.subr.bf16.mxu0 0
    %1559 = vmatpush1.bf16.msra.mxu0 %v1335
    %1560 = vmatprep.subr.bf16.mxu0 0
    %1561 = vmatpush1.bf16.msra.mxu0 %v1336
    %1562 = vmatprep.subr.bf16.mxu0 0
    %1563 = vmatpush1.bf16.msra.mxu0 %v1337
    %1564 = vmatprep.subr.bf16.mxu0 0
    %1565 = vmatpush1.bf16.msra.mxu0 %v1338
    %1566 = vmatprep.subr.bf16.mxu0 0
    %1567 = vmatpush1.bf16.msra.mxu0 %v1339
    %1568 = vmatprep.subr.bf16.mxu0 0
    %1569 = vmatpush1.bf16.msra.mxu0 %v1340
    %1570 = vmatprep.subr.bf16.mxu0 0
    %1571 = vmatpush1.bf16.msra.mxu0 %v1341
    %1572 = vmatprep.subr.bf16.mxu0 0
    %1573 = vmatpush1.bf16.msra.mxu0 %v1342
    %1574 = vmatprep.subr.bf16.mxu0 0
    %1575 = vmatpush1.bf16.msra.mxu0 %v1343
    %1576 = vmatprep.subr.bf16.mxu0 0
    %1577 = vmatpush1.bf16.msra.mxu0 %v1344
    %1578 = vmatprep.subr.bf16.mxu0 0
    %1579 = vmatpush1.bf16.msra.mxu0 %v1345
    %1580 = vmatprep.subr.bf16.mxu0 0
    %1581 = vmatpush1.bf16.msra.mxu0 %v1346
    %1582 = vmatprep.mubr.bf16.mxu0 %v849
    %1583 = vmatmul.mubr.bf16.gmra.mrb[0].mxu0 %v848
    %v1584 = vpop.f32.mrb[0].mxu0
    %v1585 = vadd.f32 %v1544, %v1584
    %v1586 = vpop.f32.mrb[0].mxu0
    %v1587 = vpop.f32.mrb[0].mxu0
    %v1588 = vadd.f32 %v1547, %v1587
    %v1589 = vpop.f32.mrb[0].mxu0
    %1590 = vdwg.mxu0
    %1591 = vmatprep.subr.bf16.mxu0 0
    %1592 = vmatpush1.bf16.msra.mxu0 %v1347
    %1593 = vmatprep.subr.bf16.mxu0 0
    %1594 = vmatpush1.bf16.msra.mxu0 %v1348
    %1595 = vmatprep.subr.bf16.mxu0 0
    %1596 = vmatpush1.bf16.msra.mxu0 %v1349
    %1597 = vmatprep.subr.bf16.mxu0 0
    %1598 = vmatpush1.bf16.msra.mxu0 %v1350
    %1599 = vmatprep.subr.bf16.mxu0 0
    %1600 = vmatpush1.bf16.msra.mxu0 %v1351
    %1601 = vmatprep.subr.bf16.mxu0 0
    %1602 = vmatpush1.bf16.msra.mxu0 %v1352
    %1603 = vmatprep.subr.bf16.mxu0 0
    %1604 = vmatpush1.bf16.msra.mxu0 %v1353
    %1605 = vmatprep.subr.bf16.mxu0 0
    %1606 = vmatpush1.bf16.msra.mxu0 %v1354
    %1607 = vmatprep.subr.bf16.mxu0 0
    %1608 = vmatpush1.bf16.msra.mxu0 0
    %1609 = vmatprep.subr.bf16.mxu0 0
    %1610 = vmatpush1.bf16.msra.mxu0 0
    %1611 = vmatprep.subr.bf16.mxu0 0
    %1612 = vmatpush1.bf16.msra.mxu0 0
    %1613 = vmatprep.subr.bf16.mxu0 0
    %1614 = vmatpush1.bf16.msra.mxu0 0
    %1615 = vmatprep.subr.bf16.mxu0 0
    %1616 = vmatpush1.bf16.msra.mxu0 0
    %1617 = vmatprep.subr.bf16.mxu0 0
    %1618 = vmatpush1.bf16.msra.mxu0 0
    %1619 = vmatprep.subr.bf16.mxu0 0
    %1620 = vmatpush1.bf16.msra.mxu0 0
    %1621 = vmatprep.subr.bf16.mxu0 0
    %1622 = vmatpush1.bf16.msra.mxu0 0
    %1623 = vmatprep.mubr.bf16.mxu0 0
    %1624 = vmatmul.mubr.bf16.gmra.mrb[0].mxu0 %v850
    %v1625 = vpop.f32.mrb[0].mxu0
    %v1626 = vadd.f32 %v1585, %v1625
    %v1627 = vpop.f32.mrb[0].mxu0
    %v1628 = vpop.f32.mrb[0].mxu0
    %v1629 = vadd.f32 %v1588, %v1628
    %v1630 = vpop.f32.mrb[0].mxu0
    %1631 = vdwg.mxu0
    %1632 = vst [vmem:[#allocation11] sm:$0xff] %v1626
    %1633 = vst [vmem:[#allocation11 + $0x8] sm:$0xff] %v1629
    // Predicated region
    $region34: #{tpu_custom_call.1} parent=1 // pred_check
      _
    $region35: #{tpu_custom_call.1} parent=1 // pred_check_branch
      %1635 = sbr.rel (0) target = $region37
    $region36: #{tpu_custom_call.1} parent=1 // pred_region
      %s1637 = ssub.s32 256, 256
      %1638 = vsyncadd [#allocation5], %s1637
      %s1639 = sshll.u32 [#allocation11], 4
      %s1640 = int_to_ptr.vmem [resolvable:$true] %s1639
      %1645 = dma.vmem_to_hbm [thread:$0]  %s1640, 256, %s4, [#allocation5], 128, 128, 8
    $region37: #{tpu_custom_call.1} parent=1 // pred_fallthru
      _
    // Predicated region
    $region38: #{tpu_custom_call.1} parent=1 // pred_check
      _
    $region39: #{tpu_custom_call.1} parent=1 // pred_check_branch
      %1647 = sbr.rel (0) target = $region41
    $region40: #{tpu_custom_call.1} parent=1 // pred_region
      %1648 = dma.done [#allocation5], 256
    $region41: #{tpu_custom_call.1} parent=1 // pred_fallthru
      _
    %1649 = vsyncpa [#allocation4], 1
    %1650 = vsyncpa [#allocation7], 1
    %1651 = vsyncpa [#allocation10], 1
    %1652 = vsyncpa [#allocation5], 1

</llo_original>
